<compile_context>
chip_gen: v5e
topology: v5e:2x2
jax: 0.10.0
libtpu: 0.0.40
codegen_flags: <defaults>
</compile_context>

<pallas_src>
import functools
import math

import jax
import jax.numpy as jnp
from jax.experimental import pallas as pl
from jax.experimental.pallas import tpu as pltpu  # noqa: F401


# ----------------------------------------------------------------------------
# Kernel 1: fused input projection for both GRU directions of one layer.
#   x_ref : (T*B, F_in)   w_ref : (F_in, 6H)   b_ref : (1, 6H)   o_ref : (T*B, 6H)
# ----------------------------------------------------------------------------
def _in_proj_kernel(x_ref, w_ref, b_ref, o_ref):
    acc = jnp.dot(
        x_ref[...].astype(jnp.bfloat16),
        w_ref[...].astype(jnp.bfloat16),
        preferred_element_type=jnp.float32,
    )
    o_ref[...] = (acc + b_ref[...]).astype(o_ref.dtype)


def pallas_in_proj(x_flat, w_t, b):
    M = x_flat.shape[0]
    N = w_t.shape[1]
    return pl.pallas_call(
        _in_proj_kernel,
        out_shape=jax.ShapeDtypeStruct((M, N), jnp.float32),
    )(x_flat, w_t, b)


# ----------------------------------------------------------------------------
# Kernel 2: fused bidirectional GRU recurrence (one call per layer).
#   gx_ref    : (T, B, 6H)  precomputed input gates; [..., :3H]=fwd, [..., 3H:]=bwd
#   whh_f_ref : (H, 3H)     forward recurrent weights (transposed)
#   whh_b_ref : (H, 3H)     backward recurrent weights (transposed)
#   bhh_ref   : (1, 6H)     recurrent biases, [fwd | bwd]
#   out_ref   : (T, B, 2H)  out[t,:,:H] = fwd hidden at t, out[t,:,H:] = bwd hidden at t
# Hidden states live in vregs via the fori_loop carry; W_hh / b_hh are loaded
# once before the loop and stay VMEM/vreg resident.
# (Explicit weight-stationary MXU driving via pltpu.matmul_push_rhs was not
#  used to keep the lowering simple and portable across v5e/v6e/v7x.)
# ----------------------------------------------------------------------------
def _bgru_recurrence_kernel(gx_ref, whh_f_ref, whh_b_ref, bhh_ref, out_ref):
    T, B, _ = gx_ref.shape
    H = whh_f_ref.shape[0]

    w_f = whh_f_ref[...].astype(jnp.bfloat16)      # (H, 3H), hoisted out of loop
    w_b = whh_b_ref[...].astype(jnp.bfloat16)
    b_f = bhh_ref[:, : 3 * H]                      # (1, 3H)
    b_b = bhh_ref[:, 3 * H :]                      # (1, 3H)

    def gru_cell(gx, gh, h_prev):
        r = jax.nn.sigmoid(gx[:, :H] + gh[:, :H])
        z = jax.nn.sigmoid(gx[:, H : 2 * H] + gh[:, H : 2 * H])
        n = jnp.tanh(gx[:, 2 * H :] + r * gh[:, 2 * H :])
        return (1.0 - z) * n + z * h_prev

    def step(t, carry):
        h_f, h_b = carry
        tb = T - 1 - t
        gx_t = gx_ref[t]                           # (B, 6H) forward input gates @ t
        gx_tb = gx_ref[tb]                         # (B, 6H) backward input gates @ T-1-t
        gh_f = (
            jnp.dot(h_f.astype(jnp.bfloat16), w_f, preferred_element_type=jnp.float32)
            + b_f
        )
        gh_b = (
            jnp.dot(h_b.astype(jnp.bfloat16), w_b, preferred_element_type=jnp.float32)
            + b_b
        )
        h_f = gru_cell(gx_t[:, : 3 * H], gh_f, h_f)
        h_b = gru_cell(gx_tb[:, 3 * H :], gh_b, h_b)
        out_ref[t, :, :H] = h_f                    # lane-tile-aligned half-row store
        out_ref[tb, :, H:] = h_b
        return h_f, h_b

    h0 = jnp.zeros((B, H), jnp.float32)
    jax.lax.fori_loop(0, T, step, (h0, h0))


def pallas_bgru_recurrence(gx, w_hh_f_t, w_hh_b_t, b_hh):
    T, B, G6 = gx.shape
    H = G6 // 6
    # TODO(synk): on v7x the two directions could be split across the two
    # TensorCores (core-parallel grid axis); kept single-core interleaved here.
    return pl.pallas_call(
        _bgru_recurrence_kernel,
        out_shape=jax.ShapeDtypeStruct((T, B, 2 * H), jnp.float32),
    )(gx, w_hh_f_t, w_hh_b_t, b_hh)


# ----------------------------------------------------------------------------
# Kernel 3: classification head.
#   x_ref : (T*B, 2H)  (t-major rows)
#   w_ref : (2H, 2*CPAD)  dense weights in cols [0:C], dense_softmax in [CPAD:CPAD+C]
#   b_ref : (1, 2*CPAD)
# Outputs: strong (T*B, C) = sigmoid(dense), weak (B, C) = attention pooling.
# ----------------------------------------------------------------------------
def _head_kernel(x_ref, w_ref, b_ref, strong_ref, weak_ref):
    TB = x_ref.shape[0]
    B, C = weak_ref.shape
    T = TB // B
    cpad = w_ref.shape[1] // 2

    xw = (
        jnp.dot(
            x_ref[...].astype(jnp.bfloat16),
            w_ref[...].astype(jnp.bfloat16),
            preferred_element_type=jnp.float32,
        )
        + b_ref[...]
    )                                              # (T*B, 2*CPAD)

    strong = jax.nn.sigmoid(xw[:, :C])             # (T*B, C)
    logits = xw[:, cpad : cpad + C]                # tile-aligned extraction
    soft = jax.nn.softmax(logits, axis=-1)
    soft = jnp.clip(soft, 1e-7, 1.0)

    strong_ref[...] = strong.astype(strong_ref.dtype)

    s3 = strong.reshape(T, B, C)
    p3 = soft.reshape(T, B, C)
    weak = (s3 * p3).sum(axis=0) / p3.sum(axis=0)  # pool over time
    weak_ref[...] = weak.astype(weak_ref.dtype)


def pallas_head(x_flat, w_t, b, *, n_class, n_batch):
    TB = x_flat.shape[0]
    return pl.pallas_call(
        _head_kernel,
        out_shape=(
            jax.ShapeDtypeStruct((TB, n_class), jnp.float32),
            jax.ShapeDtypeStruct((n_batch, n_class), jnp.float32),
        ),
    )(x_flat, w_t, b)


# ----------------------------------------------------------------------------
# Parameter construction (deterministic, PyTorch-like uniform init), with the
# fwd/bwd GRU input projections and the dense/dense_softmax heads pre-fused.
# ----------------------------------------------------------------------------
def init_params(key, embed_size=512, n_hidden=128, n_layers=2, n_class=10):
    H = n_hidden
    params = {"gru": []}

    def uni(k, shape, bound):
        return jax.random.uniform(k, shape, jnp.float32, -bound, bound)

    k_gru = 1.0 / math.sqrt(H)
    for layer in range(n_layers):
        in_dim = embed_size if layer == 0 else 2 * H
        key, kf1, kf2, kf3, kf4, kb1, kb2, kb3, kb4 = jax.random.split(key, 9)
        w_ih_f = uni(kf1, (in_dim, 3 * H), k_gru)
        w_hh_f = uni(kf2, (H, 3 * H), k_gru)
        b_ih_f = uni(kf3, (1, 3 * H), k_gru)
        b_hh_f = uni(kf4, (1, 3 * H), k_gru)
        w_ih_b = uni(kb1, (in_dim, 3 * H), k_gru)
        w_hh_b = uni(kb2, (H, 3 * H), k_gru)
        b_ih_b = uni(kb3, (1, 3 * H), k_gru)
        b_hh_b = uni(kb4, (1, 3 * H), k_gru)
        params["gru"].append(
            {
                "w_ih_t": jnp.concatenate([w_ih_f, w_ih_b], axis=1),  # (in_dim, 6H)
                "b_ih": jnp.concatenate([b_ih_f, b_ih_b], axis=1),    # (1, 6H)
                "w_hh_f_t": w_hh_f,                                   # (H, 3H)
                "w_hh_b_t": w_hh_b,                                   # (H, 3H)
                "b_hh": jnp.concatenate([b_hh_f, b_hh_b], axis=1),    # (1, 6H)
            }
        )

    dim_dense = 2 * H
    cpad = max(128, ((n_class + 127) // 128) * 128)
    k_lin = 1.0 / math.sqrt(dim_dense)
    key, k1, k2, k3, k4 = jax.random.split(key, 5)
    w_dense = uni(k1, (dim_dense, n_class), k_lin)
    b_dense = uni(k2, (1, n_class), k_lin)
    w_soft = uni(k3, (dim_dense, n_class), k_lin)
    b_soft = uni(k4, (1, n_class), k_lin)

    w_head = jnp.zeros((dim_dense, 2 * cpad), jnp.float32)
    w_head = w_head.at[:, :n_class].set(w_dense)
    w_head = w_head.at[:, cpad : cpad + n_class].set(w_soft)
    b_head = jnp.zeros((1, 2 * cpad), jnp.float32)
    b_head = b_head.at[:, :n_class].set(b_dense)
    b_head = b_head.at[:, cpad : cpad + n_class].set(b_soft)
    params["head_w_t"] = w_head
    params["head_b"] = b_head
    return params


# ----------------------------------------------------------------------------
# Full forward pass (HearDetector.forward, rnn_type='BGRU', attention=True,
# pad_mask=None, dropout layers are identity at inference).
# ----------------------------------------------------------------------------
@functools.partial(jax.jit, static_argnames=("n_class",))
def hear_detector_forward(x, params, *, n_class):
    B, T, _ = x.shape
    h = jnp.transpose(x, (1, 0, 2))                        # (T, B, E)

    for layer_p in params["gru"]:
        feat = h.reshape(T * B, h.shape[-1])               # free reshape in XLA
        gx = pallas_in_proj(feat, layer_p["w_ih_t"], layer_p["b_ih"])  # (T*B, 6H)
        H = layer_p["w_hh_f_t"].shape[0]
        h = pallas_bgru_recurrence(
            gx.reshape(T, B, 6 * H),
            layer_p["w_hh_f_t"],
            layer_p["w_hh_b_t"],
            layer_p["b_hh"],
        )                                                  # (T, B, 2H)

    # self.dropout(x) -> identity in eval mode.
    rnn_flat = h.reshape(T * B, h.shape[-1])               # (T*B, 2H), t-major rows
    strong_flat, weak = pallas_head(
        rnn_flat, params["head_w_t"], params["head_b"], n_class=n_class, n_batch=B
    )
    strong = strong_flat.reshape(T, B, n_class)
    # PyTorch returns (strong.transpose(1, 2), weak) -> (B, n_class, T), (B, n_class)
    strong = jnp.transpose(strong, (1, 2, 0))
    return strong, weak


if __name__ == "__main__":
    B, T = 2, 8
    EMBED = 512          # hear_encoder='open_l3_512'
    N_HIDDEN = 128       # n_RNN_cell
    N_LAYERS = 2         # n_layers_rnn
    N_CLASS = 10

    key = jax.random.PRNGKey(0)
    k_x, k_p = jax.random.split(key)
    x = jax.random.normal(k_x, (B, T, EMBED), dtype=jnp.float32)
    params = init_params(k_p, EMBED, N_HIDDEN, N_LAYERS, N_CLASS)

    strong, weak = hear_detector_forward(x, params, n_class=N_CLASS)
    strong = jax.block_until_ready(strong)
    weak = jax.block_until_ready(weak)

    assert strong.shape == (B, N_CLASS, T), strong.shape
    assert weak.shape == (B, N_CLASS), weak.shape
    assert bool(jnp.all(jnp.isfinite(strong))) and bool(jnp.all(jnp.isfinite(weak)))
    # strong is a sigmoid output, weak is an attention-weighted average of it.
    assert bool(jnp.all((strong >= 0.0) & (strong <= 1.0)))

    print("KERNEL_OK")
</pallas_src>

<mosaic_0001>
module attributes {stable_mosaic.version = 11 : i64} {
  func.func @_in_proj_kernel(%arg0: memref<16x512xf32, #tpu.memory_space<vmem>>, %arg1: memref<512x768xf32, #tpu.memory_space<vmem>>, %arg2: memref<1x768xf32, #tpu.memory_space<vmem>>, %arg3: memref<16x768xf32, #tpu.memory_space<vmem>>) attributes {dimension_semantics = [], scalar_prefetch = 0 : i64, scratch_operands = 0 : i64, tpu.core_type = #tpu.core_type<tc>} {
    %c0 = arith.constant 0 : index
    %c0_0 = arith.constant 0 : index
    %0 = vector.load %arg0[%c0, %c0_0] : memref<16x512xf32, #tpu.memory_space<vmem>>, vector<16x512xf32>
    %1 = arith.truncf %0 : vector<16x512xf32> to vector<16x512xbf16>
    %c0_1 = arith.constant 0 : index
    %c0_2 = arith.constant 0 : index
    %2 = vector.load %arg1[%c0_1, %c0_2] : memref<512x768xf32, #tpu.memory_space<vmem>>, vector<512x768xf32>
    %3 = arith.truncf %2 : vector<512x768xf32> to vector<512x768xbf16>
    %cst = arith.constant dense<0.000000e+00> : vector<16x768xf32>
    %4 = tpu.matmul %1, %3, %cst {dimension_numbers = #tpu.dot_dimension_numbers<[1], [0], [0], [1], [0, 0, 1, 1], [], []>} : vector<16x512xbf16>, vector<512x768xbf16>, vector<16x768xf32> -> vector<16x768xf32>
    %c0_3 = arith.constant 0 : index
    %c0_4 = arith.constant 0 : index
    %5 = vector.load %arg2[%c0_3, %c0_4] : memref<1x768xf32, #tpu.memory_space<vmem>>, vector<1x768xf32>
    %6 = vector.broadcast %5 : vector<1x768xf32> to vector<16x768xf32>
    %7 = arith.addf %4, %6 : vector<16x768xf32>
    %c0_5 = arith.constant 0 : index
    %c0_6 = arith.constant 0 : index
    %8 = vector.load %arg3[%c0_5, %c0_6] : memref<16x768xf32, #tpu.memory_space<vmem>>, vector<16x768xf32>
    tpu.vector_store %arg3[%c0_5, %c0_6], %7 {strides = array<i32>} : memref<16x768xf32, #tpu.memory_space<vmem>>, vector<16x768xf32>,
    return
  }
}

module attributes {stable_mosaic.version = 11 : i64} {
  func.func @_head_kernel(%arg0: memref<16x256xf32, #tpu.memory_space<vmem>>, %arg1: memref<256x256xf32, #tpu.memory_space<vmem>>, %arg2: memref<1x256xf32, #tpu.memory_space<vmem>>, %arg3: memref<16x10xf32, #tpu.memory_space<vmem>>, %arg4: memref<2x10xf32, #tpu.memory_space<vmem>>) attributes {dimension_semantics = [], scalar_prefetch = 0 : i64, scratch_operands = 0 : i64, tpu.core_type = #tpu.core_type<tc>} {
    %c0 = arith.constant 0 : index
    %c0_0 = arith.constant 0 : index
    %0 = vector.load %arg0[%c0, %c0_0] : memref<16x256xf32, #tpu.memory_space<vmem>>, vector<16x256xf32>
    %1 = arith.truncf %0 : vector<16x256xf32> to vector<16x256xbf16>
    %c0_1 = arith.constant 0 : index
    %c0_2 = arith.constant 0 : index
    %2 = vector.load %arg1[%c0_1, %c0_2] : memref<256x256xf32, #tpu.memory_space<vmem>>, vector<256x256xf32>
    %3 = arith.truncf %2 : vector<256x256xf32> to vector<256x256xbf16>
    %cst = arith.constant dense<0.000000e+00> : vector<16x256xf32>
    %4 = tpu.matmul %1, %3, %cst {dimension_numbers = #tpu.dot_dimension_numbers<[1], [0], [0], [1], [0, 0, 1, 1], [], []>} : vector<16x256xbf16>, vector<256x256xbf16>, vector<16x256xf32> -> vector<16x256xf32>
    %c0_3 = arith.constant 0 : index
    %c0_4 = arith.constant 0 : index
    %5 = vector.load %arg2[%c0_3, %c0_4] : memref<1x256xf32, #tpu.memory_space<vmem>>, vector<1x256xf32>
    %6 = vector.broadcast %5 : vector<1x256xf32> to vector<16x256xf32>
    %7 = arith.addf %4, %6 : vector<16x256xf32>
    %8 = vector.extract_strided_slice %7 {offsets = [0, 0], sizes = [16, 10], strides = [1, 1]} : vector<16x256xf32> to vector<16x10xf32>
    %9 = arith.negf %8 : vector<16x10xf32>
    %10 = math.exp %9 : vector<16x10xf32>
    %cst_5 = arith.constant 1.000000e+00 : f32
    %11 = vector.broadcast %cst_5 : f32 to vector<16x10xf32>
    %12 = arith.addf %11, %10 : vector<16x10xf32>
    %13 = arith.divf %11, %12 : vector<16x10xf32>
    %14 = vector.extract_strided_slice %7 {offsets = [0, 128], sizes = [16, 10], strides = [1, 1]} : vector<16x256xf32> to vector<16x10xf32>
    %cst_6 = arith.constant dense<0xFF800000> : vector<16xf32>
    %15 = vector.multi_reduction <maximumf>, %14, %cst_6 [1] : vector<16x10xf32> to vector<16xf32>
    %cst_7 = arith.constant 0xFF800000 : f32
    %16 = vector.broadcast %cst_7 : f32 to vector<16xf32>
    %17 = arith.maximumf %16, %15 : vector<16xf32>
    %18 = vector.shape_cast %17 : vector<16xf32> to vector<16x1xf32>
    %19 = vector.broadcast %18 : vector<16x1xf32> to vector<16x10xf32>
    %20 = arith.subf %14, %19 : vector<16x10xf32>
    %21 = math.exp %20 : vector<16x10xf32>
    %cst_8 = arith.constant dense<0.000000e+00> : vector<16xf32>
    %22 = vector.multi_reduction <add>, %21, %cst_8 [1] : vector<16x10xf32> to vector<16xf32>
    %23 = vector.shape_cast %22 : vector<16xf32> to vector<16x1xf32>
    %24 = vector.broadcast %23 : vector<16x1xf32> to vector<16x10xf32>
    %25 = arith.divf %21, %24 : vector<16x10xf32>
    %cst_9 = arith.constant 1.000000e-07 : f32
    %cst_10 = arith.constant 1.000000e+00 : f32
    %26 = vector.broadcast %cst_9 : f32 to vector<16x10xf32>
    %27 = arith.maximumf %26, %25 : vector<16x10xf32>
    %28 = vector.broadcast %cst_10 : f32 to vector<16x10xf32>
    %29 = arith.minimumf %28, %27 : vector<16x10xf32>
    %c0_11 = arith.constant 0 : index
    %c0_12 = arith.constant 0 : index
    %30 = vector.load %arg3[%c0_11, %c0_12] : memref<16x10xf32, #tpu.memory_space<vmem>>, vector<16x10xf32>
    tpu.vector_store %arg3[%c0_11, %c0_12], %13 {strides = array<i32>} : memref<16x10xf32, #tpu.memory_space<vmem>>, vector<16x10xf32>,
    %31 = vector.shape_cast %13 : vector<16x10xf32> to vector<8x2x10xf32>
    %32 = vector.shape_cast %29 : vector<16x10xf32> to vector<8x2x10xf32>
    %33 = arith.mulf %31, %32 : vector<8x2x10xf32>
    %cst_13 = arith.constant dense<0.000000e+00> : vector<2x10xf32>
    %34 = vector.multi_reduction <add>, %33, %cst_13 [0] : vector<8x2x10xf32> to vector<2x10xf32>
    %cst_14 = arith.constant dense<0.000000e+00> : vector<2x10xf32>
    %35 = vector.multi_reduction <add>, %32, %cst_14 [0] : vector<8x2x10xf32> to vector<2x10xf32>
    %36 = arith.divf %34, %35 : vector<2x10xf32>
    %c0_15 = arith.constant 0 : index
    %c0_16 = arith.constant 0 : index
    %37 = vector.load %arg4[%c0_15, %c0_16] : memref<2x10xf32, #tpu.memory_space<vmem>>, vector<2x10xf32>
    tpu.vector_store %arg4[%c0_15, %c0_16], %36 {strides = array<i32>} : memref<2x10xf32, #tpu.memory_space<vmem>>, vector<2x10xf32>,
    return
  }
}

module attributes {stable_mosaic.version = 11 : i64} {
  func.func @_bgru_recurrence_kernel(%arg0: memref<8x2x768xf32, #tpu.memory_space<vmem>>, %arg1: memref<128x384xf32, #tpu.memory_space<vmem>>, %arg2: memref<128x384xf32, #tpu.memory_space<vmem>>, %arg3: memref<1x768xf32, #tpu.memory_space<vmem>>, %arg4: memref<8x2x256xf32, #tpu.memory_space<vmem>>) attributes {dimension_semantics = [], scalar_prefetch = 0 : i64, scratch_operands = 0 : i64, tpu.core_type = #tpu.core_type<tc>} {
    %c0 = arith.constant 0 : index
    %c0_0 = arith.constant 0 : index
    %0 = vector.load %arg1[%c0, %c0_0] : memref<128x384xf32, #tpu.memory_space<vmem>>, vector<128x384xf32>
    %1 = arith.truncf %0 : vector<128x384xf32> to vector<128x384xbf16>
    %c0_1 = arith.constant 0 : index
    %c0_2 = arith.constant 0 : index
    %2 = vector.load %arg2[%c0_1, %c0_2] : memref<128x384xf32, #tpu.memory_space<vmem>>, vector<128x384xf32>
    %3 = arith.truncf %2 : vector<128x384xf32> to vector<128x384xbf16>
    %c0_3 = arith.constant 0 : index
    %c0_4 = arith.constant 0 : index
    %4 = vector.load %arg3[%c0_3, %c0_4] : memref<1x768xf32, #tpu.memory_space<vmem>>, vector<1x384xf32>
    %c0_5 = arith.constant 0 : index
    %c384 = arith.constant 384 : index
    %5 = vector.load %arg3[%c0_5, %c384] : memref<1x768xf32, #tpu.memory_space<vmem>>, vector<1x384xf32>
    %cst = arith.constant 0.000000e+00 : f32
    %6 = vector.broadcast %cst : f32 to vector<2x128xf32>
    %c0_i32 = arith.constant 0 : i32
    %c8_i32 = arith.constant 8 : i32
    %7 = arith.addi %c0_i32, %c8_i32 : i32
    %c1_i32 = arith.constant 1 : i32
    %8:2 = scf.for %arg5 = %c0_i32 to %7 step %c1_i32 iter_args(%arg6 = %6, %arg7 = %6) -> (vector<2x128xf32>, vector<2x128xf32>)  : i32 {
      %c7_i32 = arith.constant 7 : i32
      %9 = arith.subi %c7_i32, %arg5 : i32
      %10 = arith.index_cast %arg5 : i32 to index
      %c0_7 = arith.constant 0 : index
      %c0_8 = arith.constant 0 : index
      %11 = vector.load %arg0[%10, %c0_7, %c0_8] : memref<8x2x768xf32, #tpu.memory_space<vmem>>, vector<1x2x768xf32>
      %12 = vector.shape_cast %11 : vector<1x2x768xf32> to vector<2x768xf32>
      %13 = arith.index_cast %9 : i32 to index
      %c0_9 = arith.constant 0 : index
      %c0_10 = arith.constant 0 : index
      %14 = vector.load %arg0[%13, %c0_9, %c0_10] : memref<8x2x768xf32, #tpu.memory_space<vmem>>, vector<1x2x768xf32>
      %15 = vector.shape_cast %14 : vector<1x2x768xf32> to vector<2x768xf32>
      %16 = arith.truncf %arg6 : vector<2x128xf32> to vector<2x128xbf16>
      %cst_11 = arith.constant dense<0.000000e+00> : vector<2x384xf32>
      %17 = tpu.matmul %16, %1, %cst_11 {dimension_numbers = #tpu.dot_dimension_numbers<[1], [0], [0], [1], [0, 0, 1, 1], [], []>} : vector<2x128xbf16>, vector<128x384xbf16>, vector<2x384xf32> -> vector<2x384xf32>
      %18 = vector.broadcast %4 : vector<1x384xf32> to vector<2x384xf32>
      %19 = arith.addf %17, %18 : vector<2x384xf32>
      %20 = arith.truncf %arg7 : vector<2x128xf32> to vector<2x128xbf16>
      %cst_12 = arith.constant dense<0.000000e+00> : vector<2x384xf32>
      %21 = tpu.matmul %20, %3, %cst_12 {dimension_numbers = #tpu.dot_dimension_numbers<[1], [0], [0], [1], [0, 0, 1, 1], [], []>} : vector<2x128xbf16>, vector<128x384xbf16>, vector<2x384xf32> -> vector<2x384xf32>
      %22 = vector.broadcast %5 : vector<1x384xf32> to vector<2x384xf32>
      %23 = arith.addf %21, %22 : vector<2x384xf32>
      %24 = vector.extract_strided_slice %12 {offsets = [0, 0], sizes = [2, 384], strides = [1, 1]} : vector<2x768xf32> to vector<2x384xf32>
      %25 = vector.extract_strided_slice %24 {offsets = [0, 0], sizes = [2, 128], strides = [1, 1]} : vector<2x384xf32> to vector<2x128xf32>
      %26 = vector.extract_strided_slice %19 {offsets = [0, 0], sizes = [2, 128], strides = [1, 1]} : vector<2x384xf32> to vector<2x128xf32>
      %27 = arith.addf %25, %26 : vector<2x128xf32>
      %28 = arith.negf %27 : vector<2x128xf32>
      %29 = math.exp %28 : vector<2x128xf32>
      %cst_13 = arith.constant 1.000000e+00 : f32
      %30 = vector.broadcast %cst_13 : f32 to vector<2x128xf32>
      %31 = arith.addf %30, %29 : vector<2x128xf32>
      %32 = arith.divf %30, %31 : vector<2x128xf32>
      %33 = vector.extract_strided_slice %24 {offsets = [0, 128], sizes = [2, 128], strides = [1, 1]} : vector<2x384xf32> to vector<2x128xf32>
      %34 = vector.extract_strided_slice %19 {offsets = [0, 128], sizes = [2, 128], strides = [1, 1]} : vector<2x384xf32> to vector<2x128xf32>
      %35 = arith.addf %33, %34 : vector<2x128xf32>
      %36 = arith.negf %35 : vector<2x128xf32>
      %37 = math.exp %36 : vector<2x128xf32>
      %cst_14 = arith.constant 1.000000e+00 : f32
      %38 = vector.broadcast %cst_14 : f32 to vector<2x128xf32>
      %39 = arith.addf %38, %37 : vector<2x128xf32>
      %40 = arith.divf %38, %39 : vector<2x128xf32>
      %41 = vector.extract_strided_slice %24 {offsets = [0, 256], sizes = [2, 128], strides = [1, 1]} : vector<2x384xf32> to vector<2x128xf32>
      %42 = vector.extract_strided_slice %19 {offsets = [0, 256], sizes = [2, 128], strides = [1, 1]} : vector<2x384xf32> to vector<2x128xf32>
      %43 = arith.mulf %32, %42 : vector<2x128xf32>
      %44 = arith.addf %41, %43 : vector<2x128xf32>
      %45 = math.tanh %44 : vector<2x128xf32>
      %cst_15 = arith.constant 1.000000e+00 : f32
      %46 = vector.broadcast %cst_15 : f32 to vector<2x128xf32>
      %47 = arith.subf %46, %40 : vector<2x128xf32>
      %48 = arith.mulf %47, %45 : vector<2x128xf32>
      %49 = arith.mulf %40, %arg6 : vector<2x128xf32>
      %50 = arith.addf %48, %49 : vector<2x128xf32>
      %51 = vector.extract_strided_slice %15 {offsets = [0, 384], sizes = [2, 384], strides = [1, 1]} : vector<2x768xf32> to vector<2x384xf32>
      %52 = vector.extract_strided_slice %51 {offsets = [0, 0], sizes = [2, 128], strides = [1, 1]} : vector<2x384xf32> to vector<2x128xf32>
      %53 = vector.extract_strided_slice %23 {offsets = [0, 0], sizes = [2, 128], strides = [1, 1]} : vector<2x384xf32> to vector<2x128xf32>
      %54 = arith.addf %52, %53 : vector<2x128xf32>
      %55 = arith.negf %54 : vector<2x128xf32>
      %56 = math.exp %55 : vector<2x128xf32>
      %cst_16 = arith.constant 1.000000e+00 : f32
      %57 = vector.broadcast %cst_16 : f32 to vector<2x128xf32>
      %58 = arith.addf %57, %56 : vector<2x128xf32>
      %59 = arith.divf %57, %58 : vector<2x128xf32>
      %60 = vector.extract_strided_slice %51 {offsets = [0, 128], sizes = [2, 128], strides = [1, 1]} : vector<2x384xf32> to vector<2x128xf32>
      %61 = vector.extract_strided_slice %23 {offsets = [0, 128], sizes = [2, 128], strides = [1, 1]} : vector<2x384xf32> to vector<2x128xf32>
      %62 = arith.addf %60, %61 : vector<2x128xf32>
      %63 = arith.negf %62 : vector<2x128xf32>
      %64 = math.exp %63 : vector<2x128xf32>
      %cst_17 = arith.constant 1.000000e+00 : f32
      %65 = vector.broadcast %cst_17 : f32 to vector<2x128xf32>
      %66 = arith.addf %65, %64 : vector<2x128xf32>
      %67 = arith.divf %65, %66 : vector<2x128xf32>
      %68 = vector.extract_strided_slice %51 {offsets = [0, 256], sizes = [2, 128], strides = [1, 1]} : vector<2x384xf32> to vector<2x128xf32>
      %69 = vector.extract_strided_slice %23 {offsets = [0, 256], sizes = [2, 128], strides = [1, 1]} : vector<2x384xf32> to vector<2x128xf32>
      %70 = arith.mulf %59, %69 : vector<2x128xf32>
      %71 = arith.addf %68, %70 : vector<2x128xf32>
      %72 = math.tanh %71 : vector<2x128xf32>
      %cst_18 = arith.constant 1.000000e+00 : f32
      %73 = vector.broadcast %cst_18 : f32 to vector<2x128xf32>
      %74 = arith.subf %73, %67 : vector<2x128xf32>
      %75 = arith.mulf %74, %72 : vector<2x128xf32>
      %76 = arith.mulf %67, %arg7 : vector<2x128xf32>
      %77 = arith.addf %75, %76 : vector<2x128xf32>
      %78 = arith.index_cast %arg5 : i32 to index
      %c0_19 = arith.constant 0 : index
      %c0_20 = arith.constant 0 : index
      %79 = vector.load %arg4[%78, %c0_19, %c0_20] : memref<8x2x256xf32, #tpu.memory_space<vmem>>, vector<1x2x128xf32>
      %80 = vector.shape_cast %79 : vector<1x2x128xf32> to vector<2x128xf32>
      %81 = vector.shape_cast %50 : vector<2x128xf32> to vector<1x2x128xf32>
      tpu.vector_store %arg4[%78, %c0_19, %c0_20], %81 {strides = array<i32>} : memref<8x2x256xf32, #tpu.memory_space<vmem>>, vector<1x2x128xf32>,
      %82 = arith.index_cast %9 : i32 to index
      %c0_21 = arith.constant 0 : index
      %c128 = arith.constant 128 : index
      %83 = vector.load %arg4[%82, %c0_21, %c128] : memref<8x2x256xf32, #tpu.memory_space<vmem>>, vector<1x2x128xf32>
      %84 = vector.shape_cast %83 : vector<1x2x128xf32> to vector<2x128xf32>
      %85 = vector.shape_cast %77 : vector<2x128xf32> to vector<1x2x128xf32>
      tpu.vector_store %arg4[%82, %c0_21, %c128], %85 {strides = array<i32>} : memref<8x2x256xf32, #tpu.memory_space<vmem>>, vector<1x2x128xf32>,
      scf.yield %50, %77 : vector<2x128xf32>, vector<2x128xf32>
    }
    %c8_i32_6 = arith.constant 8 : i32
    return
  }
}

module attributes {stable_mosaic.version = 11 : i64} {
  func.func @_in_proj_kernel(%arg0: memref<16x256xf32, #tpu.memory_space<vmem>>, %arg1: memref<256x768xf32, #tpu.memory_space<vmem>>, %arg2: memref<1x768xf32, #tpu.memory_space<vmem>>, %arg3: memref<16x768xf32, #tpu.memory_space<vmem>>) attributes {dimension_semantics = [], scalar_prefetch = 0 : i64, scratch_operands = 0 : i64, tpu.core_type = #tpu.core_type<tc>} {
    %c0 = arith.constant 0 : index
    %c0_0 = arith.constant 0 : index
    %0 = vector.load %arg0[%c0, %c0_0] : memref<16x256xf32, #tpu.memory_space<vmem>>, vector<16x256xf32>
    %1 = arith.truncf %0 : vector<16x256xf32> to vector<16x256xbf16>
    %c0_1 = arith.constant 0 : index
    %c0_2 = arith.constant 0 : index
    %2 = vector.load %arg1[%c0_1, %c0_2] : memref<256x768xf32, #tpu.memory_space<vmem>>, vector<256x768xf32>
    %3 = arith.truncf %2 : vector<256x768xf32> to vector<256x768xbf16>
    %cst = arith.constant dense<0.000000e+00> : vector<16x768xf32>
    %4 = tpu.matmul %1, %3, %cst {dimension_numbers = #tpu.dot_dimension_numbers<[1], [0], [0], [1], [0, 0, 1, 1], [], []>} : vector<16x256xbf16>, vector<256x768xbf16>, vector<16x768xf32> -> vector<16x768xf32>
    %c0_3 = arith.constant 0 : index
    %c0_4 = arith.constant 0 : index
    %5 = vector.load %arg2[%c0_3, %c0_4] : memref<1x768xf32, #tpu.memory_space<vmem>>, vector<1x768xf32>
    %6 = vector.broadcast %5 : vector<1x768xf32> to vector<16x768xf32>
    %7 = arith.addf %4, %6 : vector<16x768xf32>
    %c0_5 = arith.constant 0 : index
    %c0_6 = arith.constant 0 : index
    %8 = vector.load %arg3[%c0_5, %c0_6] : memref<16x768xf32, #tpu.memory_space<vmem>>, vector<16x768xf32>
    tpu.vector_store %arg3[%c0_5, %c0_6], %7 {strides = array<i32>} : memref<16x768xf32, #tpu.memory_space<vmem>>, vector<16x768xf32>,
    return
  }
}

</mosaic_0001>

<llo_original>
// kernel: hear_detector_forward.9
$region0: #{hear_detector_forward.9}
  #allocation0 [shape = 'u32[]', space=smem, size = 0x4, offset = 0x4, fixed_abs, tag = 'smem constant byte address 0x4 - core index']
  #allocation1 [shape = 'u32[72,128]{1,0:T(1,128)}', space=vmem, size = 0x9000, scoped, tag = 'internal scratch']
  %s0 = inlined_call_operand.vmem [shape: f32[16,256], index: 0, kind: input, shape index: {}]
  %s1 = inlined_call_operand.hbm [shape: f32[256,256], index: 1, kind: input, shape index: {}]
  %s2 = inlined_call_operand.hbm [shape: f32[1,256], index: 2, kind: input, shape index: {}]
  %s3 = inlined_call_operand.vmem [shape: f32[16,10], index: 3, kind: output, shape index: {0}]
  %s4 = inlined_call_operand.hbm [shape: f32[2,10], index: 4, kind: output, shape index: {1}]
  %5 = xla_tuple %s3, %s4
  %s6 = sld [smem:[#allocation0]]
  $region38: #{hear_detector_forward.9} parent=0
    _
  %s8 = ssub.s32 1, %s6
  %s9 = scalar_select 0, %s8, %s6
  $region1: #{hear_detector_forward.9} parent=0
    #allocation2 [shape = 'u8[262144]{0}', space=vmem, size = 0x40000, scoped, tag = 'input window, operand 1, single buffered']
    #allocation3 [shape = 's32[1]{0}', space=sflag, size = 0x4, scoped, tag = 'scoped memory for hear_detector_forward.9']
    #allocation4 [shape = 's32[1]{0}', space=sflag, size = 0x4, scoped, tag = 'scoped memory for hear_detector_forward.9']
    #allocation5 [shape = 'u8[1024]{0}', space=vmem, size = 0x400, scoped, tag = 'input window, operand 2, single buffered']
    #allocation6 [shape = 's32[1]{0}', space=sflag, size = 0x4, scoped, tag = 'scoped memory for hear_detector_forward.9']
    #allocation7 [shape = 'u8[1024]{0}', space=vmem, size = 0x400, scoped, tag = 'output window, operand 1, single buffered']
    %10 = vsyncpa [#allocation3], 0
    %11 = vsyncpa [#allocation6], 0
    %12 = vsyncpa [#allocation4], 0
    // Predicated region
    $region2: #{hear_detector_forward.9} parent=1 // pred_check
      _
    $region3: #{hear_detector_forward.9} parent=1 // pred_check_branch
      %14 = sbr.rel (0) target = $region5
    $region4: #{hear_detector_forward.9} parent=1 // pred_region
      _
    $region5: #{hear_detector_forward.9} parent=1 // pred_fallthru
      _
    // Predicated region
    $region6: #{hear_detector_forward.9} parent=1 // pred_check
      _
    $region7: #{hear_detector_forward.9} parent=1 // pred_check_branch
      %16 = sbr.rel (0) target = $region9
    $region8: #{hear_detector_forward.9} parent=1 // pred_region
      %18 = vsyncadd [#allocation3], 0
      %s19 = sshll.u32 %s1, 4
      %s20 = int_to_ptr.hbm [resolvable:$true] %s19
      %s21 = sshll.u32 [#allocation2], 4
      %s22 = int_to_ptr.vmem [resolvable:$true] %s21
      %27 = dma.hbm_to_vmem [thread:$0]  %s20, 8192, %s22, [#allocation3], 256, 256, 16
    $region9: #{hear_detector_forward.9} parent=1 // pred_fallthru
      _
    // Predicated region
    $region10: #{hear_detector_forward.9} parent=1 // pred_check
      _
    $region11: #{hear_detector_forward.9} parent=1 // pred_check_branch
      %29 = sbr.rel (0) target = $region13
    $region12: #{hear_detector_forward.9} parent=1 // pred_region
      %31 = vsyncadd [#allocation6], 0
      %s33 = sshll.u32 %s2, 4
      %s34 = int_to_ptr.hbm [resolvable:$true] %s33
      %s35 = sshll.u32 [#allocation5], 4
      %s36 = int_to_ptr.vmem [resolvable:$true] %s35
      %38 = dma.hbm_to_vmem [thread:$0]  %s34, 32, %s36, [#allocation6]
    $region13: #{hear_detector_forward.9} parent=1 // pred_fallthru
      _
    // Predicated region
    $region14: #{hear_detector_forward.9} parent=1 // pred_check
      _
    $region15: #{hear_detector_forward.9} parent=1 // pred_check_branch
      %40 = sbr.rel (0) target = $region17
    $region16: #{hear_detector_forward.9} parent=1 // pred_region
      %42 = dma.done [#allocation3], 8192
    $region17: #{hear_detector_forward.9} parent=1 // pred_fallthru
      _
    // Predicated region
    $region18: #{hear_detector_forward.9} parent=1 // pred_check
      _
    $region19: #{hear_detector_forward.9} parent=1 // pred_check_branch
      %44 = sbr.rel (0) target = $region21
    $region20: #{hear_detector_forward.9} parent=1 // pred_region
      %46 = dma.done [#allocation6], 32
    $region21: #{hear_detector_forward.9} parent=1 // pred_fallthru
      _
    %v47 = vld [vmem:[%s0] sm:$0xff]
    %v48 = vld [vmem:[%s0 + $0x8] sm:$0xff]
    %v49 = vld [vmem:[%s0 + $0x10] sm:$0xff]
    %v50 = vld [vmem:[%s0 + $0x18] sm:$0xff]
    %v51 = vpack.c.bf16 %v49, %v47
    %v52 = vpack.c.bf16 %v50, %v48
    %v53 = vld [vmem:[#allocation2] sm:$0xff]
    %v54 = vld [vmem:[#allocation2 + $0x8] sm:$0xff]
    %v55 = vld [vmem:[#allocation2 + $0x10] sm:$0xff]
    %v56 = vld [vmem:[#allocation2 + $0x18] sm:$0xff]
    %v57 = vld [vmem:[#allocation2 + $0x20] sm:$0xff]
    %v58 = vld [vmem:[#allocation2 + $0x28] sm:$0xff]
    %v59 = vld [vmem:[#allocation2 + $0x30] sm:$0xff]
    %v60 = vld [vmem:[#allocation2 + $0x38] sm:$0xff]
    %v61 = vld [vmem:[#allocation2 + $0x40] sm:$0xff]
    %v62 = vld [vmem:[#allocation2 + $0x48] sm:$0xff]
    %v63 = vld [vmem:[#allocation2 + $0x50] sm:$0xff]
    %v64 = vld [vmem:[#allocation2 + $0x58] sm:$0xff]
    %v65 = vld [vmem:[#allocation2 + $0x60] sm:$0xff]
    %v66 = vld [vmem:[#allocation2 + $0x68] sm:$0xff]
    %v67 = vld [vmem:[#allocation2 + $0x70] sm:$0xff]
    %v68 = vld [vmem:[#allocation2 + $0x78] sm:$0xff]
    %v69 = vld [vmem:[#allocation2 + $0x80] sm:$0xff]
    %v70 = vld [vmem:[#allocation2 + $0x88] sm:$0xff]
    %v71 = vld [vmem:[#allocation2 + $0x90] sm:$0xff]
    %v72 = vld [vmem:[#allocation2 + $0x98] sm:$0xff]
    %v73 = vld [vmem:[#allocation2 + $0xa0] sm:$0xff]
    %v74 = vld [vmem:[#allocation2 + $0xa8] sm:$0xff]
    %v75 = vld [vmem:[#allocation2 + $0xb0] sm:$0xff]
    %v76 = vld [vmem:[#allocation2 + $0xb8] sm:$0xff]
    %v77 = vld [vmem:[#allocation2 + $0xc0] sm:$0xff]
    %v78 = vld [vmem:[#allocation2 + $0xc8] sm:$0xff]
    %v79 = vld [vmem:[#allocation2 + $0xd0] sm:$0xff]
    %v80 = vld [vmem:[#allocation2 + $0xd8] sm:$0xff]
    %v81 = vld [vmem:[#allocation2 + $0xe0] sm:$0xff]
    %v82 = vld [vmem:[#allocation2 + $0xe8] sm:$0xff]
    %v83 = vld [vmem:[#allocation2 + $0xf0] sm:$0xff]
    %v84 = vld [vmem:[#allocation2 + $0xf8] sm:$0xff]
    %v85 = vld [vmem:[#allocation2 + $0x100] sm:$0xff]
    %v86 = vld [vmem:[#allocation2 + $0x108] sm:$0xff]
    %v87 = vld [vmem:[#allocation2 + $0x110] sm:$0xff]
    %v88 = vld [vmem:[#allocation2 + $0x118] sm:$0xff]
    %v89 = vld [vmem:[#allocation2 + $0x120] sm:$0xff]
    %v90 = vld [vmem:[#allocation2 + $0x128] sm:$0xff]
    %v91 = vld [vmem:[#allocation2 + $0x130] sm:$0xff]
    %v92 = vld [vmem:[#allocation2 + $0x138] sm:$0xff]
    %v93 = vld [vmem:[#allocation2 + $0x140] sm:$0xff]
    %v94 = vld [vmem:[#allocation2 + $0x148] sm:$0xff]
    %v95 = vld [vmem:[#allocation2 + $0x150] sm:$0xff]
    %v96 = vld [vmem:[#allocation2 + $0x158] sm:$0xff]
    %v97 = vld [vmem:[#allocation2 + $0x160] sm:$0xff]
    %v98 = vld [vmem:[#allocation2 + $0x168] sm:$0xff]
    %v99 = vld [vmem:[#allocation2 + $0x170] sm:$0xff]
    %v100 = vld [vmem:[#allocation2 + $0x178] sm:$0xff]
    %v101 = vld [vmem:[#allocation2 + $0x180] sm:$0xff]
    %v102 = vld [vmem:[#allocation2 + $0x188] sm:$0xff]
    %v103 = vld [vmem:[#allocation2 + $0x190] sm:$0xff]
    %v104 = vld [vmem:[#allocation2 + $0x198] sm:$0xff]
    %v105 = vld [vmem:[#allocation2 + $0x1a0] sm:$0xff]
    %v106 = vld [vmem:[#allocation2 + $0x1a8] sm:$0xff]
    %v107 = vld [vmem:[#allocation2 + $0x1b0] sm:$0xff]
    %v108 = vld [vmem:[#allocation2 + $0x1b8] sm:$0xff]
    %v109 = vld [vmem:[#allocation2 + $0x1c0] sm:$0xff]
    %v110 = vld [vmem:[#allocation2 + $0x1c8] sm:$0xff]
    %v111 = vld [vmem:[#allocation2 + $0x1d0] sm:$0xff]
    %v112 = vld [vmem:[#allocation2 + $0x1d8] sm:$0xff]
    %v113 = vld [vmem:[#allocation2 + $0x1e0] sm:$0xff]
    %v114 = vld [vmem:[#allocation2 + $0x1e8] sm:$0xff]
    %v115 = vld [vmem:[#allocation2 + $0x1f0] sm:$0xff]
    %v116 = vld [vmem:[#allocation2 + $0x1f8] sm:$0xff]
    %v117 = vpack.c.bf16 %v55, %v53
    %v118 = vpack.c.bf16 %v56, %v54
    %v119 = vpack.c.bf16 %v59, %v57
    %v120 = vpack.c.bf16 %v60, %v58
    %v121 = vpack.c.bf16 %v63, %v61
    %v122 = vpack.c.bf16 %v64, %v62
    %v123 = vpack.c.bf16 %v67, %v65
    %v124 = vpack.c.bf16 %v68, %v66
    %v125 = vpack.c.bf16 %v71, %v69
    %v126 = vpack.c.bf16 %v72, %v70
    %v127 = vpack.c.bf16 %v75, %v73
    %v128 = vpack.c.bf16 %v76, %v74
    %v129 = vpack.c.bf16 %v79, %v77
    %v130 = vpack.c.bf16 %v80, %v78
    %v131 = vpack.c.bf16 %v83, %v81
    %v132 = vpack.c.bf16 %v84, %v82
    %v133 = vpack.c.bf16 %v87, %v85
    %v134 = vpack.c.bf16 %v88, %v86
    %v135 = vpack.c.bf16 %v91, %v89
    %v136 = vpack.c.bf16 %v92, %v90
    %v137 = vpack.c.bf16 %v95, %v93
    %v138 = vpack.c.bf16 %v96, %v94
    %v139 = vpack.c.bf16 %v99, %v97
    %v140 = vpack.c.bf16 %v100, %v98
    %v141 = vpack.c.bf16 %v103, %v101
    %v142 = vpack.c.bf16 %v104, %v102
    %v143 = vpack.c.bf16 %v107, %v105
    %v144 = vpack.c.bf16 %v108, %v106
    %v145 = vpack.c.bf16 %v111, %v109
    %v146 = vpack.c.bf16 %v112, %v110
    %v147 = vpack.c.bf16 %v115, %v113
    %v148 = vpack.c.bf16 %v116, %v114
    %v149 = vld [vmem:[#allocation5] sm:$0x3]
    %v151 = vperm.slane %v149, 0
    %v152 = vperm.slane %v149, 1
    %155 = vmatpush.bf16.msra.mxu0 %v131
    %156 = vmatpush.bf16.msra.mxu0 %v129
    %157 = vmatpush.bf16.msra.mxu0 %v127
    %158 = vmatpush.bf16.msra.mxu0 %v125
    %159 = vmatpush.bf16.msra.mxu0 %v123
    %160 = vmatpush.bf16.msra.mxu0 %v121
    %161 = vmatpush.bf16.msra.mxu0 %v119
    %162 = vmatpush.bf16.msra.mxu0 %v117
    %163 = vmatmul.bf16.gmra.mxu0 %v51
    %v164 = vpop.f32.mrf.mxu0
    %v165 = vadd.f32 %v151, %v164
    %v166 = vpop.f32.mrf.mxu0
    %v167 = vadd.f32 %v151, %v166
    %168 = vdwg.mxu0
    %169 = vmatpush.bf16.msra.mxu0 %v147
    %170 = vmatpush.bf16.msra.mxu0 %v145
    %171 = vmatpush.bf16.msra.mxu0 %v143
    %172 = vmatpush.bf16.msra.mxu0 %v141
    %173 = vmatpush.bf16.msra.mxu0 %v139
    %174 = vmatpush.bf16.msra.mxu0 %v137
    %175 = vmatpush.bf16.msra.mxu0 %v135
    %176 = vmatpush.bf16.msra.mxu0 %v133
    %177 = vmatmul.bf16.gmra.mxu0 %v52
    %v178 = vpop.f32.mrf.mxu0
    %v179 = vadd.f32 %v165, %v178
    %v180 = vpop.f32.mrf.mxu0
    %v181 = vadd.f32 %v167, %v180
    %182 = vdwg.mxu0
    %183 = vmatpush.bf16.msra.mxu0 %v132
    %184 = vmatpush.bf16.msra.mxu0 %v130
    %185 = vmatpush.bf16.msra.mxu0 %v128
    %186 = vmatpush.bf16.msra.mxu0 %v126
    %187 = vmatpush.bf16.msra.mxu0 %v124
    %188 = vmatpush.bf16.msra.mxu0 %v122
    %189 = vmatpush.bf16.msra.mxu0 %v120
    %190 = vmatpush.bf16.msra.mxu0 %v118
    %191 = vmatmul.bf16.gmra.mxu0 %v51
    %v192 = vpop.f32.mrf.mxu0
    %v193 = vadd.f32 %v152, %v192
    %v194 = vpop.f32.mrf.mxu0
    %v195 = vadd.f32 %v152, %v194
    %196 = vdwg.mxu0
    %197 = vmatpush.bf16.msra.mxu0 %v148
    %198 = vmatpush.bf16.msra.mxu0 %v146
    %199 = vmatpush.bf16.msra.mxu0 %v144
    %200 = vmatpush.bf16.msra.mxu0 %v142
    %201 = vmatpush.bf16.msra.mxu0 %v140
    %202 = vmatpush.bf16.msra.mxu0 %v138
    %203 = vmatpush.bf16.msra.mxu0 %v136
    %204 = vmatpush.bf16.msra.mxu0 %v134
    %205 = vmatmul.bf16.gmra.mxu0 %v52
    %v206 = vpop.f32.mrf.mxu0
    %v207 = vadd.f32 %v193, %v206
    %v208 = vpop.f32.mrf.mxu0
    %v209 = vadd.f32 %v195, %v208
    %210 = vdwg.mxu0
    %v211 = vxor.u32 %v179, 2147483648
    %v212 = vxor.u32 %v181, 2147483648
    %v213 = vmul.f32 %v211, 1.442695
    %v214 = vpow.pop %v213
    %v215 = vmul.f32 %v212, 1.442695
    %v216 = vpow.pop %v215
    %v217 = vadd.f32 %v214, 1.0
    %v218 = vadd.f32 %v216, 1.0
    %v219 = vrcp.pop %v217
    %v220 = vmul.f32 %v217, %v219
    %v221 = vsub.f32 1.0, %v220
    %v222 = vmul.f32 %v219, %v221
    %v223 = vadd.f32 %v219, %v222
    %vm224 = vweird.f32 %v217
    %vm225 = vweird.f32 %v219
    %vm226 = vmor %vm224, %vm225
    %v227 = vsel %vm226, %v219, %v223
    %v228 = vand.u32 2147483647, %v217
    %vm229 = vcmp.eq.f32.partialorder %v228, 8.507059e+37
    %v230 = vand.u32 %v217, 2147483648
    %v231 = vor.u32 1.1754944e-38, %v230
    %v232 = vsel %vm229, %v231, %v227
    %v233 = vmul.f32 1.0, %v232
    %v234 = vrcp.pop %v218
    %v235 = vmul.f32 %v218, %v234
    %v236 = vsub.f32 1.0, %v235
    %v237 = vmul.f32 %v234, %v236
    %v238 = vadd.f32 %v234, %v237
    %vm239 = vweird.f32 %v218
    %vm240 = vweird.f32 %v234
    %vm241 = vmor %vm239, %vm240
    %v242 = vsel %vm241, %v234, %v238
    %v243 = vand.u32 2147483647, %v218
    %vm244 = vcmp.eq.f32.partialorder %v243, 8.507059e+37
    %v245 = vand.u32 %v218, 2147483648
    %v246 = vor.u32 1.1754944e-38, %v245
    %v247 = vsel %vm244, %v246, %v242
    %v248 = vmul.f32 1.0, %v247
    %vm249 = vcmask 80896
    %v250 = vsel %vm249, %v207, -inf
    %251 = vmax.xlane.f32.xlu0 %v250
    %v252 = vpop.xlane.xlu0 %251
    %v253 = vsel %vm249, %v209, -inf
    %254 = vmax.xlane.f32.xlu0 %v253
    %v255 = vpop.xlane.xlu0 %254
    %v256 = vsub.f32 %v207, %v252
    %v257 = vsub.f32 %v209, %v255
    %v258 = vmul.f32 %v256, 1.442695
    %v259 = vpow.pop %v258
    %v260 = vmul.f32 %v257, 1.442695
    %v261 = vpow.pop %v260
    %v262 = vsel %vm249, %v259, 0.0
    %263 = vadd.xlane.f32.xlu0 %v262
    %v264 = vpop.xlane.xlu0 %263
    %v265 = vsel %vm249, %v261, 0.0
    %266 = vadd.xlane.f32.xlu0 %v265
    %v267 = vpop.xlane.xlu0 %266
    %v268 = vrcp.pop %v264
    %v269 = vmul.f32 %v264, %v268
    %v270 = vsub.f32 1.0, %v269
    %v271 = vmul.f32 %v268, %v270
    %v272 = vadd.f32 %v268, %v271
    %vm273 = vweird.f32 %v264
    %vm274 = vweird.f32 %v268
    %vm275 = vmor %vm273, %vm274
    %v276 = vsel %vm275, %v268, %v272
    %v277 = vand.u32 2147483647, %v264
    %vm278 = vcmp.eq.f32.partialorder %v277, 8.507059e+37
    %v279 = vand.u32 %v264, 2147483648
    %v280 = vor.u32 1.1754944e-38, %v279
    %v281 = vsel %vm278, %v280, %v276
    %v282 = vmul.f32 %v259, %v281
    %v283 = vrcp.pop %v267
    %v284 = vmul.f32 %v267, %v283
    %v285 = vsub.f32 1.0, %v284
    %v286 = vmul.f32 %v283, %v285
    %v287 = vadd.f32 %v283, %v286
    %vm288 = vweird.f32 %v267
    %vm289 = vweird.f32 %v283
    %vm290 = vmor %vm288, %vm289
    %v291 = vsel %vm290, %v283, %v287
    %v292 = vand.u32 2147483647, %v267
    %vm293 = vcmp.eq.f32.partialorder %v292, 8.507059e+37
    %v294 = vand.u32 %v267, 2147483648
    %v295 = vor.u32 1.1754944e-38, %v294
    %v296 = vsel %vm293, %v295, %v291
    %v297 = vmul.f32 %v261, %v296
    %v298 = vmax.f32 %v282, 1e-07
    %v299 = vmax.f32 %v297, 1e-07
    %v300 = vmin.f32 %v298, 1.0
    %v301 = vmin.f32 %v299, 1.0
    %302 = vst.msk [vmem:[%s3] sm:$0xff] %vm249, %v233
    %303 = vst.msk [vmem:[%s3 + $0x8] sm:$0xff] %vm249, %v248
    %v306 = vrot.slane %v233, 2
    %v307 = vrot.slane %v233, 4
    %v308 = vrot.slane %v233, 6
    %v309 = vrot.slane %v248, 2
    %v310 = vrot.slane %v248, 4
    %v311 = vrot.slane %v248, 6
    %v320 = vrot.slane %v300, 2
    %v321 = vrot.slane %v300, 4
    %v322 = vrot.slane %v300, 6
    %v323 = vrot.slane %v301, 2
    %v324 = vrot.slane %v301, 4
    %v325 = vrot.slane %v301, 6
    %v332 = vmul.f32 %v233, %v300
    %v333 = vmul.f32 %v306, %v320
    %v334 = vmul.f32 %v307, %v321
    %v335 = vmul.f32 %v308, %v322
    %v336 = vmul.f32 %v248, %v301
    %v337 = vmul.f32 %v309, %v323
    %v338 = vmul.f32 %v310, %v324
    %v339 = vmul.f32 %v311, %v325
    %vm340 = vcmask 74752
    %v341 = vsel %vm340, %v332, 0.0
    %v342 = vsel %vm340, %v333, 0.0
    %v343 = vadd.f32 %v341, %v342
    %v344 = vsel %vm340, %v334, 0.0
    %v345 = vadd.f32 %v343, %v344
    %v346 = vsel %vm340, %v335, 0.0
    %v347 = vadd.f32 %v345, %v346
    %v348 = vsel %vm340, %v336, 0.0
    %v349 = vadd.f32 %v347, %v348
    %v350 = vsel %vm340, %v337, 0.0
    %v351 = vadd.f32 %v349, %v350
    %v352 = vsel %vm340, %v338, 0.0
    %v353 = vadd.f32 %v351, %v352
    %v354 = vsel %vm340, %v339, 0.0
    %v355 = vadd.f32 %v353, %v354
    %v356 = vsel %vm340, %v300, 0.0
    %v357 = vsel %vm340, %v320, 0.0
    %v358 = vadd.f32 %v356, %v357
    %v359 = vsel %vm340, %v321, 0.0
    %v360 = vadd.f32 %v358, %v359
    %v361 = vsel %vm340, %v322, 0.0
    %v362 = vadd.f32 %v360, %v361
    %v363 = vsel %vm340, %v301, 0.0
    %v364 = vadd.f32 %v362, %v363
    %v365 = vsel %vm340, %v323, 0.0
    %v366 = vadd.f32 %v364, %v365
    %v367 = vsel %vm340, %v324, 0.0
    %v368 = vadd.f32 %v366, %v367
    %v369 = vsel %vm340, %v325, 0.0
    %v370 = vadd.f32 %v368, %v369
    %v371 = vrcp.pop %v370
    %v372 = vmul.f32 %v370, %v371
    %v373 = vsub.f32 1.0, %v372
    %v374 = vmul.f32 %v371, %v373
    %v375 = vadd.f32 %v371, %v374
    %vm376 = vweird.f32 %v370
    %vm377 = vweird.f32 %v371
    %vm378 = vmor %vm376, %vm377
    %v379 = vsel %vm378, %v371, %v375
    %v380 = vand.u32 2147483647, %v370
    %vm381 = vcmp.eq.f32.partialorder %v380, 8.507059e+37
    %v382 = vand.u32 %v370, 2147483648
    %v383 = vor.u32 1.1754944e-38, %v382
    %v384 = vsel %vm381, %v383, %v379
    %v385 = vmul.f32 %v355, %v384
    %386 = vst.msk [vmem:[#allocation7] sm:$0x3] %vm340, %v385
    // Predicated region
    $region22: #{hear_detector_forward.9} parent=1 // pred_check
      _
    $region23: #{hear_detector_forward.9} parent=1 // pred_check_branch
      %388 = sbr.rel (0) target = $region25
    $region24: #{hear_detector_forward.9} parent=1 // pred_region
      _
    $region25: #{hear_detector_forward.9} parent=1 // pred_fallthru
      _
    // Predicated region
    $region26: #{hear_detector_forward.9} parent=1 // pred_check
      _
    $region27: #{hear_detector_forward.9} parent=1 // pred_check_branch
      %390 = sbr.rel (0) target = $region29
    $region28: #{hear_detector_forward.9} parent=1 // pred_region
      %392 = vsyncadd [#allocation4], 0
      %s394 = sshll.u32 [#allocation7], 4
      %s395 = int_to_ptr.vmem [resolvable:$true] %s394
      %s396 = sshll.u32 %s4, 4
      %s397 = int_to_ptr.hbm [resolvable:$true] %s396
      %399 = dma.vmem_to_hbm [thread:$0]  %s395, 32, %s397, [#allocation4]
    $region29: #{hear_detector_forward.9} parent=1 // pred_fallthru
      _
    // Predicated region
    $region30: #{hear_detector_forward.9} parent=1 // pred_check
      _
    $region31: #{hear_detector_forward.9} parent=1 // pred_check_branch
      %401 = sbr.rel (0) target = $region33
    $region32: #{hear_detector_forward.9} parent=1 // pred_region
      _
    $region33: #{hear_detector_forward.9} parent=1 // pred_fallthru
      _
    // Predicated region
    $region34: #{hear_detector_forward.9} parent=1 // pred_check
      _
    $region35: #{hear_detector_forward.9} parent=1 // pred_check_branch
      %403 = sbr.rel (0) target = $region37
    $region36: #{hear_detector_forward.9} parent=1 // pred_region
      %405 = dma.done [#allocation4], 32
    $region37: #{hear_detector_forward.9} parent=1 // pred_fallthru
      _
    %406 = vsyncpa [#allocation3], 1
    %407 = vsyncpa [#allocation6], 1
    %408 = vsyncpa [#allocation4], 1

// kernel: hear_detector_forward.6
$region0: #{hear_detector_forward.6}
  #allocation0 [shape = 'u32[]', space=smem, size = 0x4, offset = 0x4, fixed_abs, tag = 'smem constant byte address 0x4 - core index']
  #allocation1 [shape = 'u32[72,128]{1,0:T(1,128)}', space=vmem, size = 0x9000, scoped, tag = 'internal scratch']
  %s0 = inlined_call_operand.vmem [shape: f32[8,2,768], index: 0, kind: input, shape index: {}]
  %s1 = inlined_call_operand.hbm [shape: f32[128,384], index: 1, kind: input, shape index: {}]
  %s2 = inlined_call_operand.hbm [shape: f32[128,384], index: 2, kind: input, shape index: {}]
  %s3 = inlined_call_operand.hbm [shape: f32[1,768], index: 3, kind: input, shape index: {}]
  %s4 = inlined_call_operand.vmem [shape: f32[8,2,256], index: 4, kind: output, shape index: {}]
  %s5 = sld [smem:[#allocation0]]
  $region45: #{hear_detector_forward.6} parent=0
    _
  %s7 = ssub.s32 1, %s5
  %s8 = scalar_select 0, %s7, %s5
  $region1: #{hear_detector_forward.6} parent=0
    #allocation2 [shape = 'u8[196608]{0}', space=vmem, size = 0x30000, scoped, tag = 'input window, operand 1, single buffered']
    #allocation3 [shape = 's32[1]{0}', space=sflag, size = 0x4, scoped, tag = 'scoped memory for hear_detector_forward.6']
    #allocation4 [shape = 'u8[196608]{0}', space=vmem, size = 0x30000, scoped, tag = 'input window, operand 2, single buffered']
    #allocation5 [shape = 's32[1]{0}', space=sflag, size = 0x4, scoped, tag = 'scoped memory for hear_detector_forward.6']
    #allocation6 [shape = 'u8[3072]{0}', space=vmem, size = 0xc00, scoped, tag = 'input window, operand 3, single buffered']
    %9 = vsyncpa [#allocation3], 0
    %10 = vsyncpa [#allocation5], 0
    // Predicated region
    $region2: #{hear_detector_forward.6} parent=1 // pred_check
      _
    $region3: #{hear_detector_forward.6} parent=1 // pred_check_branch
      %12 = sbr.rel (0) target = $region5
    $region4: #{hear_detector_forward.6} parent=1 // pred_region
      _
    $region5: #{hear_detector_forward.6} parent=1 // pred_fallthru
      _
    // Predicated region
    $region6: #{hear_detector_forward.6} parent=1 // pred_check
      _
    $region7: #{hear_detector_forward.6} parent=1 // pred_check_branch
      %14 = sbr.rel (0) target = $region9
    $region8: #{hear_detector_forward.6} parent=1 // pred_region
      %16 = vsyncadd [#allocation3], 0
      %s17 = sshll.u32 %s1, 4
      %s18 = int_to_ptr.hbm [resolvable:$true] %s17
      %s19 = sshll.u32 [#allocation2], 4
      %s20 = int_to_ptr.vmem [resolvable:$true] %s19
      %25 = dma.hbm_to_vmem [thread:$0]  %s18, 6144, %s20, [#allocation3], 384, 384, 24
    $region9: #{hear_detector_forward.6} parent=1 // pred_fallthru
      _
    // Predicated region
    $region10: #{hear_detector_forward.6} parent=1 // pred_check
      _
    $region11: #{hear_detector_forward.6} parent=1 // pred_check_branch
      %27 = sbr.rel (0) target = $region13
    $region12: #{hear_detector_forward.6} parent=1 // pred_region
      %29 = vsyncadd [#allocation5], 0
      %s30 = sshll.u32 %s2, 4
      %s31 = int_to_ptr.hbm [resolvable:$true] %s30
      %s32 = sshll.u32 [#allocation4], 4
      %s33 = int_to_ptr.vmem [resolvable:$true] %s32
      %38 = dma.hbm_to_vmem [thread:$0]  %s31, 6144, %s33, [#allocation5], 384, 384, 24
    $region13: #{hear_detector_forward.6} parent=1 // pred_fallthru
      _
    // Predicated region
    $region14: #{hear_detector_forward.6} parent=1 // pred_check
      _
    $region15: #{hear_detector_forward.6} parent=1 // pred_check_branch
      %40 = sbr.rel (0) target = $region17
    $region16: #{hear_detector_forward.6} parent=1 // pred_region
      %42 = vsyncadd [#allocation5], 0
      %s44 = sshll.u32 %s3, 4
      %s45 = int_to_ptr.hbm [resolvable:$true] %s44
      %s46 = sshll.u32 [#allocation6], 4
      %s47 = int_to_ptr.vmem [resolvable:$true] %s46
      %49 = dma.hbm_to_vmem [thread:$0]  %s45, 96, %s47, [#allocation5]
    $region17: #{hear_detector_forward.6} parent=1 // pred_fallthru
      _
    // Predicated region
    $region18: #{hear_detector_forward.6} parent=1 // pred_check
      _
    $region19: #{hear_detector_forward.6} parent=1 // pred_check_branch
      %51 = sbr.rel (0) target = $region21
    $region20: #{hear_detector_forward.6} parent=1 // pred_region
      %53 = dma.done [#allocation3], 6144
    $region21: #{hear_detector_forward.6} parent=1 // pred_fallthru
      _
    // Predicated region
    $region22: #{hear_detector_forward.6} parent=1 // pred_check
      _
    $region23: #{hear_detector_forward.6} parent=1 // pred_check_branch
      %55 = sbr.rel (0) target = $region25
    $region24: #{hear_detector_forward.6} parent=1 // pred_region
      %57 = dma.done [#allocation5], 6144
    $region25: #{hear_detector_forward.6} parent=1 // pred_fallthru
      _
    // Predicated region
    $region26: #{hear_detector_forward.6} parent=1 // pred_check
      _
    $region27: #{hear_detector_forward.6} parent=1 // pred_check_branch
      %59 = sbr.rel (0) target = $region29
    $region28: #{hear_detector_forward.6} parent=1 // pred_region
      %61 = dma.done [#allocation5], 96
    $region29: #{hear_detector_forward.6} parent=1 // pred_fallthru
      _
    %v62 = vld [vmem:[#allocation2] sm:$0xff]
    %v63 = vld [vmem:[#allocation2 + $0x8] sm:$0xff]
    %v64 = vld [vmem:[#allocation2 + $0x10] sm:$0xff]
    %v65 = vld [vmem:[#allocation2 + $0x18] sm:$0xff]
    %v66 = vld [vmem:[#allocation2 + $0x20] sm:$0xff]
    %v67 = vld [vmem:[#allocation2 + $0x28] sm:$0xff]
    %v68 = vld [vmem:[#allocation2 + $0x30] sm:$0xff]
    %v69 = vld [vmem:[#allocation2 + $0x38] sm:$0xff]
    %v70 = vld [vmem:[#allocation2 + $0x40] sm:$0xff]
    %v71 = vld [vmem:[#allocation2 + $0x48] sm:$0xff]
    %v72 = vld [vmem:[#allocation2 + $0x50] sm:$0xff]
    %v73 = vld [vmem:[#allocation2 + $0x58] sm:$0xff]
    %v74 = vld [vmem:[#allocation2 + $0x60] sm:$0xff]
    %v75 = vld [vmem:[#allocation2 + $0x68] sm:$0xff]
    %v76 = vld [vmem:[#allocation2 + $0x70] sm:$0xff]
    %v77 = vld [vmem:[#allocation2 + $0x78] sm:$0xff]
    %v78 = vld [vmem:[#allocation2 + $0x80] sm:$0xff]
    %v79 = vld [vmem:[#allocation2 + $0x88] sm:$0xff]
    %v80 = vld [vmem:[#allocation2 + $0x90] sm:$0xff]
    %v81 = vld [vmem:[#allocation2 + $0x98] sm:$0xff]
    %v82 = vld [vmem:[#allocation2 + $0xa0] sm:$0xff]
    %v83 = vld [vmem:[#allocation2 + $0xa8] sm:$0xff]
    %v84 = vld [vmem:[#allocation2 + $0xb0] sm:$0xff]
    %v85 = vld [vmem:[#allocation2 + $0xb8] sm:$0xff]
    %v86 = vld [vmem:[#allocation2 + $0xc0] sm:$0xff]
    %v87 = vld [vmem:[#allocation2 + $0xc8] sm:$0xff]
    %v88 = vld [vmem:[#allocation2 + $0xd0] sm:$0xff]
    %v89 = vld [vmem:[#allocation2 + $0xd8] sm:$0xff]
    %v90 = vld [vmem:[#allocation2 + $0xe0] sm:$0xff]
    %v91 = vld [vmem:[#allocation2 + $0xe8] sm:$0xff]
    %v92 = vld [vmem:[#allocation2 + $0xf0] sm:$0xff]
    %v93 = vld [vmem:[#allocation2 + $0xf8] sm:$0xff]
    %v94 = vld [vmem:[#allocation2 + $0x100] sm:$0xff]
    %v95 = vld [vmem:[#allocation2 + $0x108] sm:$0xff]
    %v96 = vld [vmem:[#allocation2 + $0x110] sm:$0xff]
    %v97 = vld [vmem:[#allocation2 + $0x118] sm:$0xff]
    %v98 = vld [vmem:[#allocation2 + $0x120] sm:$0xff]
    %v99 = vld [vmem:[#allocation2 + $0x128] sm:$0xff]
    %v100 = vld [vmem:[#allocation2 + $0x130] sm:$0xff]
    %v101 = vld [vmem:[#allocation2 + $0x138] sm:$0xff]
    %v102 = vld [vmem:[#allocation2 + $0x140] sm:$0xff]
    %v103 = vld [vmem:[#allocation2 + $0x148] sm:$0xff]
    %v104 = vld [vmem:[#allocation2 + $0x150] sm:$0xff]
    %v105 = vld [vmem:[#allocation2 + $0x158] sm:$0xff]
    %v106 = vld [vmem:[#allocation2 + $0x160] sm:$0xff]
    %v107 = vld [vmem:[#allocation2 + $0x168] sm:$0xff]
    %v108 = vld [vmem:[#allocation2 + $0x170] sm:$0xff]
    %v109 = vld [vmem:[#allocation2 + $0x178] sm:$0xff]
    %v110 = vpack.c.bf16 %v65, %v62
    %v111 = vpack.c.bf16 %v66, %v63
    %v112 = vpack.c.bf16 %v67, %v64
    %v113 = vpack.c.bf16 %v71, %v68
    %v114 = vpack.c.bf16 %v72, %v69
    %v115 = vpack.c.bf16 %v73, %v70
    %v116 = vpack.c.bf16 %v77, %v74
    %v117 = vpack.c.bf16 %v78, %v75
    %v118 = vpack.c.bf16 %v79, %v76
    %v119 = vpack.c.bf16 %v83, %v80
    %v120 = vpack.c.bf16 %v84, %v81
    %v121 = vpack.c.bf16 %v85, %v82
    %v122 = vpack.c.bf16 %v89, %v86
    %v123 = vpack.c.bf16 %v90, %v87
    %v124 = vpack.c.bf16 %v91, %v88
    %v125 = vpack.c.bf16 %v95, %v92
    %v126 = vpack.c.bf16 %v96, %v93
    %v127 = vpack.c.bf16 %v97, %v94
    %v128 = vpack.c.bf16 %v101, %v98
    %v129 = vpack.c.bf16 %v102, %v99
    %v130 = vpack.c.bf16 %v103, %v100
    %v131 = vpack.c.bf16 %v107, %v104
    %v132 = vpack.c.bf16 %v108, %v105
    %v133 = vpack.c.bf16 %v109, %v106
    %v134 = vld [vmem:[#allocation4] sm:$0xff]
    %v135 = vld [vmem:[#allocation4 + $0x8] sm:$0xff]
    %v136 = vld [vmem:[#allocation4 + $0x10] sm:$0xff]
    %v137 = vld [vmem:[#allocation4 + $0x18] sm:$0xff]
    %v138 = vld [vmem:[#allocation4 + $0x20] sm:$0xff]
    %v139 = vld [vmem:[#allocation4 + $0x28] sm:$0xff]
    %v140 = vld [vmem:[#allocation4 + $0x30] sm:$0xff]
    %v141 = vld [vmem:[#allocation4 + $0x38] sm:$0xff]
    %v142 = vld [vmem:[#allocation4 + $0x40] sm:$0xff]
    %v143 = vld [vmem:[#allocation4 + $0x48] sm:$0xff]
    %v144 = vld [vmem:[#allocation4 + $0x50] sm:$0xff]
    %v145 = vld [vmem:[#allocation4 + $0x58] sm:$0xff]
    %v146 = vld [vmem:[#allocation4 + $0x60] sm:$0xff]
    %v147 = vld [vmem:[#allocation4 + $0x68] sm:$0xff]
    %v148 = vld [vmem:[#allocation4 + $0x70] sm:$0xff]
    %v149 = vld [vmem:[#allocation4 + $0x78] sm:$0xff]
    %v150 = vld [vmem:[#allocation4 + $0x80] sm:$0xff]
    %v151 = vld [vmem:[#allocation4 + $0x88] sm:$0xff]
    %v152 = vld [vmem:[#allocation4 + $0x90] sm:$0xff]
    %v153 = vld [vmem:[#allocation4 + $0x98] sm:$0xff]
    %v154 = vld [vmem:[#allocation4 + $0xa0] sm:$0xff]
    %v155 = vld [vmem:[#allocation4 + $0xa8] sm:$0xff]
    %v156 = vld [vmem:[#allocation4 + $0xb0] sm:$0xff]
    %v157 = vld [vmem:[#allocation4 + $0xb8] sm:$0xff]
    %v158 = vld [vmem:[#allocation4 + $0xc0] sm:$0xff]
    %v159 = vld [vmem:[#allocation4 + $0xc8] sm:$0xff]
    %v160 = vld [vmem:[#allocation4 + $0xd0] sm:$0xff]
    %v161 = vld [vmem:[#allocation4 + $0xd8] sm:$0xff]
    %v162 = vld [vmem:[#allocation4 + $0xe0] sm:$0xff]
    %v163 = vld [vmem:[#allocation4 + $0xe8] sm:$0xff]
    %v164 = vld [vmem:[#allocation4 + $0xf0] sm:$0xff]
    %v165 = vld [vmem:[#allocation4 + $0xf8] sm:$0xff]
    %v166 = vld [vmem:[#allocation4 + $0x100] sm:$0xff]
    %v167 = vld [vmem:[#allocation4 + $0x108] sm:$0xff]
    %v168 = vld [vmem:[#allocation4 + $0x110] sm:$0xff]
    %v169 = vld [vmem:[#allocation4 + $0x118] sm:$0xff]
    %v170 = vld [vmem:[#allocation4 + $0x120] sm:$0xff]
    %v171 = vld [vmem:[#allocation4 + $0x128] sm:$0xff]
    %v172 = vld [vmem:[#allocation4 + $0x130] sm:$0xff]
    %v173 = vld [vmem:[#allocation4 + $0x138] sm:$0xff]
    %v174 = vld [vmem:[#allocation4 + $0x140] sm:$0xff]
    %v175 = vld [vmem:[#allocation4 + $0x148] sm:$0xff]
    %v176 = vld [vmem:[#allocation4 + $0x150] sm:$0xff]
    %v177 = vld [vmem:[#allocation4 + $0x158] sm:$0xff]
    %v178 = vld [vmem:[#allocation4 + $0x160] sm:$0xff]
    %v179 = vld [vmem:[#allocation4 + $0x168] sm:$0xff]
    %v180 = vld [vmem:[#allocation4 + $0x170] sm:$0xff]
    %v181 = vld [vmem:[#allocation4 + $0x178] sm:$0xff]
    %v182 = vpack.c.bf16 %v137, %v134
    %v183 = vpack.c.bf16 %v138, %v135
    %v184 = vpack.c.bf16 %v139, %v136
    %v185 = vpack.c.bf16 %v143, %v140
    %v186 = vpack.c.bf16 %v144, %v141
    %v187 = vpack.c.bf16 %v145, %v142
    %v188 = vpack.c.bf16 %v149, %v146
    %v189 = vpack.c.bf16 %v150, %v147
    %v190 = vpack.c.bf16 %v151, %v148
    %v191 = vpack.c.bf16 %v155, %v152
    %v192 = vpack.c.bf16 %v156, %v153
    %v193 = vpack.c.bf16 %v157, %v154
    %v194 = vpack.c.bf16 %v161, %v158
    %v195 = vpack.c.bf16 %v162, %v159
    %v196 = vpack.c.bf16 %v163, %v160
    %v197 = vpack.c.bf16 %v167, %v164
    %v198 = vpack.c.bf16 %v168, %v165
    %v199 = vpack.c.bf16 %v169, %v166
    %v200 = vpack.c.bf16 %v173, %v170
    %v201 = vpack.c.bf16 %v174, %v171
    %v202 = vpack.c.bf16 %v175, %v172
    %v203 = vpack.c.bf16 %v179, %v176
    %v204 = vpack.c.bf16 %v180, %v177
    %v205 = vpack.c.bf16 %v181, %v178
    %v206 = vld [vmem:[#allocation6] sm:$0x7]
    %v207 = vld [vmem:[#allocation6 + $0x3] sm:$0x7]
    loop: start=0, step=1, limit=8
    $region30: #{hear_detector_forward.6} parent=1 // loop_pre_header
      _
    $region31: #{hear_detector_forward.6} parent=1 // loop_header
      %s209 = sphi 0, %s213
      %p210 = scmp.ge.s32.totalorder %s209, 8
      %v214 = vphi 0.0, %v371
      %v215 = vphi 0.0, %v424
    $region32: #{hear_detector_forward.6} parent=1 // loop_header_branch
      %212 = sbr.rel (%p210) target = $region36
    $region33: #{hear_detector_forward.6} parent=1 // loop_body
      %s216 = ssub.s32 7, %s209
      %s217 = smul.u32 %s209, 6
      %s218 = smul.addr %s217, 2
      %s219 = scalar_lea.vmem %s0, %s218
      %v220 = vld [vmem:[%s219] sm:$0xff]
      %s221 = smul.u32 %s216, 6
      %s222 = smul.addr %s221, 2
      %s223 = scalar_lea.vmem %s0, %s222
      %v224 = vld [vmem:[%s223] sm:$0xff]
      %v225 = vld [vmem:[%s223 + $0x8] sm:$0xf]
      %v226 = vpack.c.bf16 %v214, %v214
      %v228 = vperm.slane %v206, 0
      %v229 = vperm.slane %v206, 1
      %v230 = vperm.slane %v206, 2
      %234 = vmatpush.bf16.msra.mxu0 %v131
      %235 = vmatpush.bf16.msra.mxu0 %v128
      %236 = vmatpush.bf16.msra.mxu0 %v125
      %237 = vmatpush.bf16.msra.mxu0 %v122
      %238 = vmatpush.bf16.msra.mxu0 %v119
      %239 = vmatpush.bf16.msra.mxu0 %v116
      %240 = vmatpush.bf16.msra.mxu0 %v113
      %241 = vmatpush.bf16.msra.mxu0 %v110
      %242 = vmatmul.bf16.gmra.mxu0 %v226
      %v243 = vpop.f32.mrf.mxu0
      %v244 = vadd.f32 %v228, %v243
      %v245 = vpop.f32.mrf.mxu0
      %246 = vdwg.mxu0
      %247 = vmatpush.bf16.msra.mxu0 %v132
      %248 = vmatpush.bf16.msra.mxu0 %v129
      %249 = vmatpush.bf16.msra.mxu0 %v126
      %250 = vmatpush.bf16.msra.mxu0 %v123
      %251 = vmatpush.bf16.msra.mxu0 %v120
      %252 = vmatpush.bf16.msra.mxu0 %v117
      %253 = vmatpush.bf16.msra.mxu0 %v114
      %254 = vmatpush.bf16.msra.mxu0 %v111
      %255 = vmatmul.bf16.gmra.mxu0 %v226
      %v256 = vpop.f32.mrf.mxu0
      %v257 = vadd.f32 %v229, %v256
      %v258 = vpop.f32.mrf.mxu0
      %259 = vdwg.mxu0
      %260 = vmatpush.bf16.msra.mxu0 %v133
      %261 = vmatpush.bf16.msra.mxu0 %v130
      %262 = vmatpush.bf16.msra.mxu0 %v127
      %263 = vmatpush.bf16.msra.mxu0 %v124
      %264 = vmatpush.bf16.msra.mxu0 %v121
      %265 = vmatpush.bf16.msra.mxu0 %v118
      %266 = vmatpush.bf16.msra.mxu0 %v115
      %267 = vmatpush.bf16.msra.mxu0 %v112
      %268 = vmatmul.bf16.gmra.mxu0 %v226
      %v269 = vpop.f32.mrf.mxu0
      %v270 = vadd.f32 %v230, %v269
      %v271 = vpop.f32.mrf.mxu0
      %272 = vdwg.mxu0
      %v273 = vpack.c.bf16 %v215, %v215
      %v275 = vperm.slane %v207, 0
      %v276 = vperm.slane %v207, 1
      %v277 = vperm.slane %v207, 2
      %281 = vmatpush.bf16.msra.mxu0 %v203
      %282 = vmatpush.bf16.msra.mxu0 %v200
      %283 = vmatpush.bf16.msra.mxu0 %v197
      %284 = vmatpush.bf16.msra.mxu0 %v194
      %285 = vmatpush.bf16.msra.mxu0 %v191
      %286 = vmatpush.bf16.msra.mxu0 %v188
      %287 = vmatpush.bf16.msra.mxu0 %v185
      %288 = vmatpush.bf16.msra.mxu0 %v182
      %289 = vmatmul.bf16.gmra.mxu0 %v273
      %v290 = vpop.f32.mrf.mxu0
      %v291 = vadd.f32 %v275, %v290
      %v292 = vpop.f32.mrf.mxu0
      %293 = vdwg.mxu0
      %294 = vmatpush.bf16.msra.mxu0 %v204
      %295 = vmatpush.bf16.msra.mxu0 %v201
      %296 = vmatpush.bf16.msra.mxu0 %v198
      %297 = vmatpush.bf16.msra.mxu0 %v195
      %298 = vmatpush.bf16.msra.mxu0 %v192
      %299 = vmatpush.bf16.msra.mxu0 %v189
      %300 = vmatpush.bf16.msra.mxu0 %v186
      %301 = vmatpush.bf16.msra.mxu0 %v183
      %302 = vmatmul.bf16.gmra.mxu0 %v273
      %v303 = vpop.f32.mrf.mxu0
      %v304 = vadd.f32 %v276, %v303
      %v305 = vpop.f32.mrf.mxu0
      %306 = vdwg.mxu0
      %307 = vmatpush.bf16.msra.mxu0 %v205
      %308 = vmatpush.bf16.msra.mxu0 %v202
      %309 = vmatpush.bf16.msra.mxu0 %v199
      %310 = vmatpush.bf16.msra.mxu0 %v196
      %311 = vmatpush.bf16.msra.mxu0 %v193
      %312 = vmatpush.bf16.msra.mxu0 %v190
      %313 = vmatpush.bf16.msra.mxu0 %v187
      %314 = vmatpush.bf16.msra.mxu0 %v184
      %315 = vmatmul.bf16.gmra.mxu0 %v273
      %v316 = vpop.f32.mrf.mxu0
      %v317 = vadd.f32 %v277, %v316
      %v318 = vpop.f32.mrf.mxu0
      %319 = vdwg.mxu0
      %v320 = vadd.f32 %v220, %v244
      %v321 = vxor.u32 %v320, 2147483648
      %v322 = vmul.f32 %v321, 1.442695
      %v323 = vpow.pop %v322
      %v324 = vadd.f32 %v323, 1.0
      %v325 = vrcp.pop %v324
      %v326 = vmul.f32 %v324, %v325
      %v327 = vsub.f32 1.0, %v326
      %v328 = vmul.f32 %v325, %v327
      %v329 = vadd.f32 %v325, %v328
      %vm330 = vweird.f32 %v324
      %vm331 = vweird.f32 %v325
      %vm332 = vmor %vm330, %vm331
      %v333 = vsel %vm332, %v325, %v329
      %v334 = vand.u32 2147483647, %v324
      %vm335 = vcmp.eq.f32.partialorder %v334, 8.507059e+37
      %v336 = vand.u32 %v324, 2147483648
      %v337 = vor.u32 1.1754944e-38, %v336
      %v338 = vsel %vm335, %v337, %v333
      %v339 = vmul.f32 1.0, %v338
      %v341 = vrot.slane %v220, 2
      %v343 = vadd.f32 %v341, %v257
      %v344 = vxor.u32 %v343, 2147483648
      %v345 = vmul.f32 %v344, 1.442695
      %v346 = vpow.pop %v345
      %v347 = vadd.f32 %v346, 1.0
      %v348 = vrcp.pop %v347
      %v349 = vmul.f32 %v347, %v348
      %v350 = vsub.f32 1.0, %v349
      %v351 = vmul.f32 %v348, %v350
      %v352 = vadd.f32 %v348, %v351
      %vm353 = vweird.f32 %v347
      %vm354 = vweird.f32 %v348
      %vm355 = vmor %vm353, %vm354
      %v356 = vsel %vm355, %v348, %v352
      %v357 = vand.u32 2147483647, %v347
      %vm358 = vcmp.eq.f32.partialorder %v357, 8.507059e+37
      %v359 = vand.u32 %v347, 2147483648
      %v360 = vor.u32 1.1754944e-38, %v359
      %v361 = vsel %vm358, %v360, %v356
      %v362 = vmul.f32 1.0, %v361
      %v363 = vmul.f32 %v339, %v270
      %v364 = vrot.slane %v220, 4
      %v366 = vadd.f32 %v364, %v363
      %v367 = vtanh.pop %v366
      %v368 = vsub.f32 1.0, %v362
      %v369 = vmul.f32 %v368, %v367
      %v370 = vmul.f32 %v362, %v214
      %v371 = vadd.f32 %v369, %v370
      %v373 = vrot.slane %v224, 6
      %v375 = vadd.f32 %v373, %v291
      %v376 = vxor.u32 %v375, 2147483648
      %v377 = vmul.f32 %v376, 1.442695
      %v378 = vpow.pop %v377
      %v379 = vadd.f32 %v378, 1.0
      %v380 = vrcp.pop %v379
      %v381 = vmul.f32 %v379, %v380
      %v382 = vsub.f32 1.0, %v381
      %v383 = vmul.f32 %v380, %v382
      %v384 = vadd.f32 %v380, %v383
      %vm385 = vweird.f32 %v379
      %vm386 = vweird.f32 %v380
      %vm387 = vmor %vm385, %vm386
      %v388 = vsel %vm387, %v380, %v384
      %v389 = vand.u32 2147483647, %v379
      %vm390 = vcmp.eq.f32.partialorder %v389, 8.507059e+37
      %v391 = vand.u32 %v379, 2147483648
      %v392 = vor.u32 1.1754944e-38, %v391
      %v393 = vsel %vm390, %v392, %v388
      %v394 = vmul.f32 1.0, %v393
      %v395 = vadd.f32 %v225, %v304
      %v396 = vxor.u32 %v395, 2147483648
      %v397 = vmul.f32 %v396, 1.442695
      %v398 = vpow.pop %v397
      %v399 = vadd.f32 %v398, 1.0
      %v400 = vrcp.pop %v399
      %v401 = vmul.f32 %v399, %v400
      %v402 = vsub.f32 1.0, %v401
      %v403 = vmul.f32 %v400, %v402
      %v404 = vadd.f32 %v400, %v403
      %vm405 = vweird.f32 %v399
      %vm406 = vweird.f32 %v400
      %vm407 = vmor %vm405, %vm406
      %v408 = vsel %vm407, %v400, %v404
      %v409 = vand.u32 2147483647, %v399
      %vm410 = vcmp.eq.f32.partialorder %v409, 8.507059e+37
      %v411 = vand.u32 %v399, 2147483648
      %v412 = vor.u32 1.1754944e-38, %v411
      %v413 = vsel %vm410, %v412, %v408
      %v414 = vmul.f32 1.0, %v413
      %v415 = vmul.f32 %v394, %v317
      %v417 = vrot.slane %v225, 2
      %v419 = vadd.f32 %v417, %v415
      %v420 = vtanh.pop %v419
      %v421 = vsub.f32 1.0, %v414
      %v422 = vmul.f32 %v421, %v420
      %v423 = vmul.f32 %v414, %v215
      %v424 = vadd.f32 %v422, %v423
      %s425 = smul.u32 %s209, 2
      %s426 = smul.addr %s425, 2
      %s427 = scalar_lea.vmem %s4, %s426
      %428 = vst [vmem:[%s427] sm:$0x3] %v371
      %s429 = smul.u32 %s216, 2
      %s430 = smul.addr %s429, 2
      %s431 = scalar_lea.vmem %s4, %s430
      %432 = vst [vmem:[%s431 + $0x2] sm:$0x3] %v424
    $region34: #{hear_detector_forward.6} parent=1 // loop_footer
      %s213 = sadd.s32 1, %s209
    $region35: #{hear_detector_forward.6} parent=1 // loop_footer_branch
      %208 = sbr.rel target = $region31
    $region36: #{hear_detector_forward.6} parent=1 // loop_exit
      _
    // Predicated region
    $region37: #{hear_detector_forward.6} parent=1 // pred_check
      _
    $region38: #{hear_detector_forward.6} parent=1 // pred_check_branch
      %434 = sbr.rel (0) target = $region40
    $region39: #{hear_detector_forward.6} parent=1 // pred_region
      _
    $region40: #{hear_detector_forward.6} parent=1 // pred_fallthru
      _
    // Predicated region
    $region41: #{hear_detector_forward.6} parent=1 // pred_check
      _
    $region42: #{hear_detector_forward.6} parent=1 // pred_check_branch
      %436 = sbr.rel (0) target = $region44
    $region43: #{hear_detector_forward.6} parent=1 // pred_region
      _
    $region44: #{hear_detector_forward.6} parent=1 // pred_fallthru
      _
    %437 = vsyncpa [#allocation3], 1
    %438 = vsyncpa [#allocation5], 1

// kernel: hear_detector_forward.7
$region0: #{hear_detector_forward.7}
  #allocation0 [shape = 'u32[]', space=smem, size = 0x4, offset = 0x4, fixed_abs, tag = 'smem constant byte address 0x4 - core index']
  #allocation1 [shape = 'u32[72,128]{1,0:T(1,128)}', space=vmem, size = 0x9000, scoped, tag = 'internal scratch']
  %s0 = inlined_call_operand.vmem [shape: f32[16,256], index: 0, kind: input, shape index: {}]
  %s1 = inlined_call_operand.hbm [shape: f32[256,768], index: 1, kind: input, shape index: {}]
  %s2 = inlined_call_operand.hbm [shape: f32[1,768], index: 2, kind: input, shape index: {}]
  %s3 = inlined_call_operand.vmem [shape: f32[16,768], index: 3, kind: output, shape index: {}]
  %s4 = sld [smem:[#allocation0]]
  $region30: #{hear_detector_forward.7} parent=0
    _
  %s6 = ssub.s32 1, %s4
  %s7 = scalar_select 0, %s6, %s4
  $region1: #{hear_detector_forward.7} parent=0
    #allocation2 [shape = 'u8[786432]{0}', space=vmem, size = 0xc0000, scoped, tag = 'input window, operand 1, single buffered']
    #allocation3 [shape = 's32[1]{0}', space=sflag, size = 0x4, scoped, tag = 'scoped memory for hear_detector_forward.7']
    #allocation4 [shape = 'u8[3072]{0}', space=vmem, size = 0xc00, scoped, tag = 'input window, operand 2, single buffered']
    #allocation5 [shape = 's32[1]{0}', space=sflag, size = 0x4, scoped, tag = 'scoped memory for hear_detector_forward.7']
    %8 = vsyncpa [#allocation3], 0
    %9 = vsyncpa [#allocation5], 0
    // Predicated region
    $region2: #{hear_detector_forward.7} parent=1 // pred_check
      _
    $region3: #{hear_detector_forward.7} parent=1 // pred_check_branch
      %11 = sbr.rel (0) target = $region5
    $region4: #{hear_detector_forward.7} parent=1 // pred_region
      _
    $region5: #{hear_detector_forward.7} parent=1 // pred_fallthru
      _
    // Predicated region
    $region6: #{hear_detector_forward.7} parent=1 // pred_check
      _
    $region7: #{hear_detector_forward.7} parent=1 // pred_check_branch
      %13 = sbr.rel (0) target = $region9
    $region8: #{hear_detector_forward.7} parent=1 // pred_region
      %15 = vsyncadd [#allocation3], 0
      %s16 = sshll.u32 %s1, 4
      %s17 = int_to_ptr.hbm [resolvable:$true] %s16
      %s18 = sshll.u32 [#allocation2], 4
      %s19 = int_to_ptr.vmem [resolvable:$true] %s18
      %24 = dma.hbm_to_vmem [thread:$0]  %s17, 24576, %s19, [#allocation3], 768, 768, 48
    $region9: #{hear_detector_forward.7} parent=1 // pred_fallthru
      _
    // Predicated region
    $region10: #{hear_detector_forward.7} parent=1 // pred_check
      _
    $region11: #{hear_detector_forward.7} parent=1 // pred_check_branch
      %26 = sbr.rel (0) target = $region13
    $region12: #{hear_detector_forward.7} parent=1 // pred_region
      %28 = vsyncadd [#allocation5], 0
      %s30 = sshll.u32 %s2, 4
      %s31 = int_to_ptr.hbm [resolvable:$true] %s30
      %s32 = sshll.u32 [#allocation4], 4
      %s33 = int_to_ptr.vmem [resolvable:$true] %s32
      %35 = dma.hbm_to_vmem [thread:$0]  %s31, 96, %s33, [#allocation5]
    $region13: #{hear_detector_forward.7} parent=1 // pred_fallthru
      _
    // Predicated region
    $region14: #{hear_detector_forward.7} parent=1 // pred_check
      _
    $region15: #{hear_detector_forward.7} parent=1 // pred_check_branch
      %37 = sbr.rel (0) target = $region17
    $region16: #{hear_detector_forward.7} parent=1 // pred_region
      %39 = dma.done [#allocation3], 24576
    $region17: #{hear_detector_forward.7} parent=1 // pred_fallthru
      _
    // Predicated region
    $region18: #{hear_detector_forward.7} parent=1 // pred_check
      _
    $region19: #{hear_detector_forward.7} parent=1 // pred_check_branch
      %41 = sbr.rel (0) target = $region21
    $region20: #{hear_detector_forward.7} parent=1 // pred_region
      %43 = dma.done [#allocation5], 96
    $region21: #{hear_detector_forward.7} parent=1 // pred_fallthru
      _
    %v44 = vld [vmem:[%s0] sm:$0xff]
    %v45 = vld [vmem:[%s0 + $0x8] sm:$0xff]
    %v46 = vld [vmem:[%s0 + $0x10] sm:$0xff]
    %v47 = vld [vmem:[%s0 + $0x18] sm:$0xff]
    %v48 = vpack.c.bf16 %v46, %v44
    %v49 = vpack.c.bf16 %v47, %v45
    %v50 = vld [vmem:[#allocation2] sm:$0xff]
    %v51 = vld [vmem:[#allocation2 + $0x8] sm:$0xff]
    %v52 = vld [vmem:[#allocation2 + $0x10] sm:$0xff]
    %v53 = vld [vmem:[#allocation2 + $0x18] sm:$0xff]
    %v54 = vld [vmem:[#allocation2 + $0x20] sm:$0xff]
    %v55 = vld [vmem:[#allocation2 + $0x28] sm:$0xff]
    %v56 = vld [vmem:[#allocation2 + $0x30] sm:$0xff]
    %v57 = vld [vmem:[#allocation2 + $0x38] sm:$0xff]
    %v58 = vld [vmem:[#allocation2 + $0x40] sm:$0xff]
    %v59 = vld [vmem:[#allocation2 + $0x48] sm:$0xff]
    %v60 = vld [vmem:[#allocation2 + $0x50] sm:$0xff]
    %v61 = vld [vmem:[#allocation2 + $0x58] sm:$0xff]
    %v62 = vld [vmem:[#allocation2 + $0x60] sm:$0xff]
    %v63 = vld [vmem:[#allocation2 + $0x68] sm:$0xff]
    %v64 = vld [vmem:[#allocation2 + $0x70] sm:$0xff]
    %v65 = vld [vmem:[#allocation2 + $0x78] sm:$0xff]
    %v66 = vld [vmem:[#allocation2 + $0x80] sm:$0xff]
    %v67 = vld [vmem:[#allocation2 + $0x88] sm:$0xff]
    %v68 = vld [vmem:[#allocation2 + $0x90] sm:$0xff]
    %v69 = vld [vmem:[#allocation2 + $0x98] sm:$0xff]
    %v70 = vld [vmem:[#allocation2 + $0xa0] sm:$0xff]
    %v71 = vld [vmem:[#allocation2 + $0xa8] sm:$0xff]
    %v72 = vld [vmem:[#allocation2 + $0xb0] sm:$0xff]
    %v73 = vld [vmem:[#allocation2 + $0xb8] sm:$0xff]
    %v74 = vld [vmem:[#allocation2 + $0xc0] sm:$0xff]
    %v75 = vld [vmem:[#allocation2 + $0xc8] sm:$0xff]
    %v76 = vld [vmem:[#allocation2 + $0xd0] sm:$0xff]
    %v77 = vld [vmem:[#allocation2 + $0xd8] sm:$0xff]
    %v78 = vld [vmem:[#allocation2 + $0xe0] sm:$0xff]
    %v79 = vld [vmem:[#allocation2 + $0xe8] sm:$0xff]
    %v80 = vld [vmem:[#allocation2 + $0xf0] sm:$0xff]
    %v81 = vld [vmem:[#allocation2 + $0xf8] sm:$0xff]
    %v82 = vld [vmem:[#allocation2 + $0x100] sm:$0xff]
    %v83 = vld [vmem:[#allocation2 + $0x108] sm:$0xff]
    %v84 = vld [vmem:[#allocation2 + $0x110] sm:$0xff]
    %v85 = vld [vmem:[#allocation2 + $0x118] sm:$0xff]
    %v86 = vld [vmem:[#allocation2 + $0x120] sm:$0xff]
    %v87 = vld [vmem:[#allocation2 + $0x128] sm:$0xff]
    %v88 = vld [vmem:[#allocation2 + $0x130] sm:$0xff]
    %v89 = vld [vmem:[#allocation2 + $0x138] sm:$0xff]
    %v90 = vld [vmem:[#allocation2 + $0x140] sm:$0xff]
    %v91 = vld [vmem:[#allocation2 + $0x148] sm:$0xff]
    %v92 = vld [vmem:[#allocation2 + $0x150] sm:$0xff]
    %v93 = vld [vmem:[#allocation2 + $0x158] sm:$0xff]
    %v94 = vld [vmem:[#allocation2 + $0x160] sm:$0xff]
    %v95 = vld [vmem:[#allocation2 + $0x168] sm:$0xff]
    %v96 = vld [vmem:[#allocation2 + $0x170] sm:$0xff]
    %v97 = vld [vmem:[#allocation2 + $0x178] sm:$0xff]
    %v98 = vld [vmem:[#allocation2 + $0x180] sm:$0xff]
    %v99 = vld [vmem:[#allocation2 + $0x188] sm:$0xff]
    %v100 = vld [vmem:[#allocation2 + $0x190] sm:$0xff]
    %v101 = vld [vmem:[#allocation2 + $0x198] sm:$0xff]
    %v102 = vld [vmem:[#allocation2 + $0x1a0] sm:$0xff]
    %v103 = vld [vmem:[#allocation2 + $0x1a8] sm:$0xff]
    %v104 = vld [vmem:[#allocation2 + $0x1b0] sm:$0xff]
    %v105 = vld [vmem:[#allocation2 + $0x1b8] sm:$0xff]
    %v106 = vld [vmem:[#allocation2 + $0x1c0] sm:$0xff]
    %v107 = vld [vmem:[#allocation2 + $0x1c8] sm:$0xff]
    %v108 = vld [vmem:[#allocation2 + $0x1d0] sm:$0xff]
    %v109 = vld [vmem:[#allocation2 + $0x1d8] sm:$0xff]
    %v110 = vld [vmem:[#allocation2 + $0x1e0] sm:$0xff]
    %v111 = vld [vmem:[#allocation2 + $0x1e8] sm:$0xff]
    %v112 = vld [vmem:[#allocation2 + $0x1f0] sm:$0xff]
    %v113 = vld [vmem:[#allocation2 + $0x1f8] sm:$0xff]
    %v114 = vld [vmem:[#allocation2 + $0x200] sm:$0xff]
    %v115 = vld [vmem:[#allocation2 + $0x208] sm:$0xff]
    %v116 = vld [vmem:[#allocation2 + $0x210] sm:$0xff]
    %v117 = vld [vmem:[#allocation2 + $0x218] sm:$0xff]
    %v118 = vld [vmem:[#allocation2 + $0x220] sm:$0xff]
    %v119 = vld [vmem:[#allocation2 + $0x228] sm:$0xff]
    %v120 = vld [vmem:[#allocation2 + $0x230] sm:$0xff]
    %v121 = vld [vmem:[#allocation2 + $0x238] sm:$0xff]
    %v122 = vld [vmem:[#allocation2 + $0x240] sm:$0xff]
    %v123 = vld [vmem:[#allocation2 + $0x248] sm:$0xff]
    %v124 = vld [vmem:[#allocation2 + $0x250] sm:$0xff]
    %v125 = vld [vmem:[#allocation2 + $0x258] sm:$0xff]
    %v126 = vld [vmem:[#allocation2 + $0x260] sm:$0xff]
    %v127 = vld [vmem:[#allocation2 + $0x268] sm:$0xff]
    %v128 = vld [vmem:[#allocation2 + $0x270] sm:$0xff]
    %v129 = vld [vmem:[#allocation2 + $0x278] sm:$0xff]
    %v130 = vld [vmem:[#allocation2 + $0x280] sm:$0xff]
    %v131 = vld [vmem:[#allocation2 + $0x288] sm:$0xff]
    %v132 = vld [vmem:[#allocation2 + $0x290] sm:$0xff]
    %v133 = vld [vmem:[#allocation2 + $0x298] sm:$0xff]
    %v134 = vld [vmem:[#allocation2 + $0x2a0] sm:$0xff]
    %v135 = vld [vmem:[#allocation2 + $0x2a8] sm:$0xff]
    %v136 = vld [vmem:[#allocation2 + $0x2b0] sm:$0xff]
    %v137 = vld [vmem:[#allocation2 + $0x2b8] sm:$0xff]
    %v138 = vld [vmem:[#allocation2 + $0x2c0] sm:$0xff]
    %v139 = vld [vmem:[#allocation2 + $0x2c8] sm:$0xff]
    %v140 = vld [vmem:[#allocation2 + $0x2d0] sm:$0xff]
    %v141 = vld [vmem:[#allocation2 + $0x2d8] sm:$0xff]
    %v142 = vld [vmem:[#allocation2 + $0x2e0] sm:$0xff]
    %v143 = vld [vmem:[#allocation2 + $0x2e8] sm:$0xff]
    %v144 = vld [vmem:[#allocation2 + $0x2f0] sm:$0xff]
    %v145 = vld [vmem:[#allocation2 + $0x2f8] sm:$0xff]
    %v146 = vld [vmem:[#allocation2 + $0x300] sm:$0xff]
    %v147 = vld [vmem:[#allocation2 + $0x308] sm:$0xff]
    %v148 = vld [vmem:[#allocation2 + $0x310] sm:$0xff]
    %v149 = vld [vmem:[#allocation2 + $0x318] sm:$0xff]
    %v150 = vld [vmem:[#allocation2 + $0x320] sm:$0xff]
    %v151 = vld [vmem:[#allocation2 + $0x328] sm:$0xff]
    %v152 = vld [vmem:[#allocation2 + $0x330] sm:$0xff]
    %v153 = vld [vmem:[#allocation2 + $0x338] sm:$0xff]
    %v154 = vld [vmem:[#allocation2 + $0x340] sm:$0xff]
    %v155 = vld [vmem:[#allocation2 + $0x348] sm:$0xff]
    %v156 = vld [vmem:[#allocation2 + $0x350] sm:$0xff]
    %v157 = vld [vmem:[#allocation2 + $0x358] sm:$0xff]
    %v158 = vld [vmem:[#allocation2 + $0x360] sm:$0xff]
    %v159 = vld [vmem:[#allocation2 + $0x368] sm:$0xff]
    %v160 = vld [vmem:[#allocation2 + $0x370] sm:$0xff]
    %v161 = vld [vmem:[#allocation2 + $0x378] sm:$0xff]
    %v162 = vld [vmem:[#allocation2 + $0x380] sm:$0xff]
    %v163 = vld [vmem:[#allocation2 + $0x388] sm:$0xff]
    %v164 = vld [vmem:[#allocation2 + $0x390] sm:$0xff]
    %v165 = vld [vmem:[#allocation2 + $0x398] sm:$0xff]
    %v166 = vld [vmem:[#allocation2 + $0x3a0] sm:$0xff]
    %v167 = vld [vmem:[#allocation2 + $0x3a8] sm:$0xff]
    %v168 = vld [vmem:[#allocation2 + $0x3b0] sm:$0xff]
    %v169 = vld [vmem:[#allocation2 + $0x3b8] sm:$0xff]
    %v170 = vld [vmem:[#allocation2 + $0x3c0] sm:$0xff]
    %v171 = vld [vmem:[#allocation2 + $0x3c8] sm:$0xff]
    %v172 = vld [vmem:[#allocation2 + $0x3d0] sm:$0xff]
    %v173 = vld [vmem:[#allocation2 + $0x3d8] sm:$0xff]
    %v174 = vld [vmem:[#allocation2 + $0x3e0] sm:$0xff]
    %v175 = vld [vmem:[#allocation2 + $0x3e8] sm:$0xff]
    %v176 = vld [vmem:[#allocation2 + $0x3f0] sm:$0xff]
    %v177 = vld [vmem:[#allocation2 + $0x3f8] sm:$0xff]
    %v178 = vld [vmem:[#allocation2 + $0x400] sm:$0xff]
    %v179 = vld [vmem:[#allocation2 + $0x408] sm:$0xff]
    %v180 = vld [vmem:[#allocation2 + $0x410] sm:$0xff]
    %v181 = vld [vmem:[#allocation2 + $0x418] sm:$0xff]
    %v182 = vld [vmem:[#allocation2 + $0x420] sm:$0xff]
    %v183 = vld [vmem:[#allocation2 + $0x428] sm:$0xff]
    %v184 = vld [vmem:[#allocation2 + $0x430] sm:$0xff]
    %v185 = vld [vmem:[#allocation2 + $0x438] sm:$0xff]
    %v186 = vld [vmem:[#allocation2 + $0x440] sm:$0xff]
    %v187 = vld [vmem:[#allocation2 + $0x448] sm:$0xff]
    %v188 = vld [vmem:[#allocation2 + $0x450] sm:$0xff]
    %v189 = vld [vmem:[#allocation2 + $0x458] sm:$0xff]
    %v190 = vld [vmem:[#allocation2 + $0x460] sm:$0xff]
    %v191 = vld [vmem:[#allocation2 + $0x468] sm:$0xff]
    %v192 = vld [vmem:[#allocation2 + $0x470] sm:$0xff]
    %v193 = vld [vmem:[#allocation2 + $0x478] sm:$0xff]
    %v194 = vld [vmem:[#allocation2 + $0x480] sm:$0xff]
    %v195 = vld [vmem:[#allocation2 + $0x488] sm:$0xff]
    %v196 = vld [vmem:[#allocation2 + $0x490] sm:$0xff]
    %v197 = vld [vmem:[#allocation2 + $0x498] sm:$0xff]
    %v198 = vld [vmem:[#allocation2 + $0x4a0] sm:$0xff]
    %v199 = vld [vmem:[#allocation2 + $0x4a8] sm:$0xff]
    %v200 = vld [vmem:[#allocation2 + $0x4b0] sm:$0xff]
    %v201 = vld [vmem:[#allocation2 + $0x4b8] sm:$0xff]
    %v202 = vld [vmem:[#allocation2 + $0x4c0] sm:$0xff]
    %v203 = vld [vmem:[#allocation2 + $0x4c8] sm:$0xff]
    %v204 = vld [vmem:[#allocation2 + $0x4d0] sm:$0xff]
    %v205 = vld [vmem:[#allocation2 + $0x4d8] sm:$0xff]
    %v206 = vld [vmem:[#allocation2 + $0x4e0] sm:$0xff]
    %v207 = vld [vmem:[#allocation2 + $0x4e8] sm:$0xff]
    %v208 = vld [vmem:[#allocation2 + $0x4f0] sm:$0xff]
    %v209 = vld [vmem:[#allocation2 + $0x4f8] sm:$0xff]
    %v210 = vld [vmem:[#allocation2 + $0x500] sm:$0xff]
    %v211 = vld [vmem:[#allocation2 + $0x508] sm:$0xff]
    %v212 = vld [vmem:[#allocation2 + $0x510] sm:$0xff]
    %v213 = vld [vmem:[#allocation2 + $0x518] sm:$0xff]
    %v214 = vld [vmem:[#allocation2 + $0x520] sm:$0xff]
    %v215 = vld [vmem:[#allocation2 + $0x528] sm:$0xff]
    %v216 = vld [vmem:[#allocation2 + $0x530] sm:$0xff]
    %v217 = vld [vmem:[#allocation2 + $0x538] sm:$0xff]
    %v218 = vld [vmem:[#allocation2 + $0x540] sm:$0xff]
    %v219 = vld [vmem:[#allocation2 + $0x548] sm:$0xff]
    %v220 = vld [vmem:[#allocation2 + $0x550] sm:$0xff]
    %v221 = vld [vmem:[#allocation2 + $0x558] sm:$0xff]
    %v222 = vld [vmem:[#allocation2 + $0x560] sm:$0xff]
    %v223 = vld [vmem:[#allocation2 + $0x568] sm:$0xff]
    %v224 = vld [vmem:[#allocation2 + $0x570] sm:$0xff]
    %v225 = vld [vmem:[#allocation2 + $0x578] sm:$0xff]
    %v226 = vld [vmem:[#allocation2 + $0x580] sm:$0xff]
    %v227 = vld [vmem:[#allocation2 + $0x588] sm:$0xff]
    %v228 = vld [vmem:[#allocation2 + $0x590] sm:$0xff]
    %v229 = vld [vmem:[#allocation2 + $0x598] sm:$0xff]
    %v230 = vld [vmem:[#allocation2 + $0x5a0] sm:$0xff]
    %v231 = vld [vmem:[#allocation2 + $0x5a8] sm:$0xff]
    %v232 = vld [vmem:[#allocation2 + $0x5b0] sm:$0xff]
    %v233 = vld [vmem:[#allocation2 + $0x5b8] sm:$0xff]
    %v234 = vld [vmem:[#allocation2 + $0x5c0] sm:$0xff]
    %v235 = vld [vmem:[#allocation2 + $0x5c8] sm:$0xff]
    %v236 = vld [vmem:[#allocation2 + $0x5d0] sm:$0xff]
    %v237 = vld [vmem:[#allocation2 + $0x5d8] sm:$0xff]
    %v238 = vld [vmem:[#allocation2 + $0x5e0] sm:$0xff]
    %v239 = vld [vmem:[#allocation2 + $0x5e8] sm:$0xff]
    %v240 = vld [vmem:[#allocation2 + $0x5f0] sm:$0xff]
    %v241 = vld [vmem:[#allocation2 + $0x5f8] sm:$0xff]
    %v242 = vpack.c.bf16 %v56, %v50
    %v243 = vpack.c.bf16 %v57, %v51
    %v244 = vpack.c.bf16 %v58, %v52
    %v245 = vpack.c.bf16 %v59, %v53
    %v246 = vpack.c.bf16 %v60, %v54
    %v247 = vpack.c.bf16 %v61, %v55
    %v248 = vpack.c.bf16 %v68, %v62
    %v249 = vpack.c.bf16 %v69, %v63
    %v250 = vpack.c.bf16 %v70, %v64
    %v251 = vpack.c.bf16 %v71, %v65
    %v252 = vpack.c.bf16 %v72, %v66
    %v253 = vpack.c.bf16 %v73, %v67
    %v254 = vpack.c.bf16 %v80, %v74
    %v255 = vpack.c.bf16 %v81, %v75
    %v256 = vpack.c.bf16 %v82, %v76
    %v257 = vpack.c.bf16 %v83, %v77
    %v258 = vpack.c.bf16 %v84, %v78
    %v259 = vpack.c.bf16 %v85, %v79
    %v260 = vpack.c.bf16 %v92, %v86
    %v261 = vpack.c.bf16 %v93, %v87
    %v262 = vpack.c.bf16 %v94, %v88
    %v263 = vpack.c.bf16 %v95, %v89
    %v264 = vpack.c.bf16 %v96, %v90
    %v265 = vpack.c.bf16 %v97, %v91
    %v266 = vpack.c.bf16 %v104, %v98
    %v267 = vpack.c.bf16 %v105, %v99
    %v268 = vpack.c.bf16 %v106, %v100
    %v269 = vpack.c.bf16 %v107, %v101
    %v270 = vpack.c.bf16 %v108, %v102
    %v271 = vpack.c.bf16 %v109, %v103
    %v272 = vpack.c.bf16 %v116, %v110
    %v273 = vpack.c.bf16 %v117, %v111
    %v274 = vpack.c.bf16 %v118, %v112
    %v275 = vpack.c.bf16 %v119, %v113
    %v276 = vpack.c.bf16 %v120, %v114
    %v277 = vpack.c.bf16 %v121, %v115
    %v278 = vpack.c.bf16 %v128, %v122
    %v279 = vpack.c.bf16 %v129, %v123
    %v280 = vpack.c.bf16 %v130, %v124
    %v281 = vpack.c.bf16 %v131, %v125
    %v282 = vpack.c.bf16 %v132, %v126
    %v283 = vpack.c.bf16 %v133, %v127
    %v284 = vpack.c.bf16 %v140, %v134
    %v285 = vpack.c.bf16 %v141, %v135
    %v286 = vpack.c.bf16 %v142, %v136
    %v287 = vpack.c.bf16 %v143, %v137
    %v288 = vpack.c.bf16 %v144, %v138
    %v289 = vpack.c.bf16 %v145, %v139
    %v290 = vpack.c.bf16 %v152, %v146
    %v291 = vpack.c.bf16 %v153, %v147
    %v292 = vpack.c.bf16 %v154, %v148
    %v293 = vpack.c.bf16 %v155, %v149
    %v294 = vpack.c.bf16 %v156, %v150
    %v295 = vpack.c.bf16 %v157, %v151
    %v296 = vpack.c.bf16 %v164, %v158
    %v297 = vpack.c.bf16 %v165, %v159
    %v298 = vpack.c.bf16 %v166, %v160
    %v299 = vpack.c.bf16 %v167, %v161
    %v300 = vpack.c.bf16 %v168, %v162
    %v301 = vpack.c.bf16 %v169, %v163
    %v302 = vpack.c.bf16 %v176, %v170
    %v303 = vpack.c.bf16 %v177, %v171
    %v304 = vpack.c.bf16 %v178, %v172
    %v305 = vpack.c.bf16 %v179, %v173
    %v306 = vpack.c.bf16 %v180, %v174
    %v307 = vpack.c.bf16 %v181, %v175
    %v308 = vpack.c.bf16 %v188, %v182
    %v309 = vpack.c.bf16 %v189, %v183
    %v310 = vpack.c.bf16 %v190, %v184
    %v311 = vpack.c.bf16 %v191, %v185
    %v312 = vpack.c.bf16 %v192, %v186
    %v313 = vpack.c.bf16 %v193, %v187
    %v314 = vpack.c.bf16 %v200, %v194
    %v315 = vpack.c.bf16 %v201, %v195
    %v316 = vpack.c.bf16 %v202, %v196
    %v317 = vpack.c.bf16 %v203, %v197
    %v318 = vpack.c.bf16 %v204, %v198
    %v319 = vpack.c.bf16 %v205, %v199
    %v320 = vpack.c.bf16 %v212, %v206
    %v321 = vpack.c.bf16 %v213, %v207
    %v322 = vpack.c.bf16 %v214, %v208
    %v323 = vpack.c.bf16 %v215, %v209
    %v324 = vpack.c.bf16 %v216, %v210
    %v325 = vpack.c.bf16 %v217, %v211
    %v326 = vpack.c.bf16 %v224, %v218
    %v327 = vpack.c.bf16 %v225, %v219
    %v328 = vpack.c.bf16 %v226, %v220
    %v329 = vpack.c.bf16 %v227, %v221
    %v330 = vpack.c.bf16 %v228, %v222
    %v331 = vpack.c.bf16 %v229, %v223
    %v332 = vpack.c.bf16 %v236, %v230
    %v333 = vpack.c.bf16 %v237, %v231
    %v334 = vpack.c.bf16 %v238, %v232
    %v335 = vpack.c.bf16 %v239, %v233
    %v336 = vpack.c.bf16 %v240, %v234
    %v337 = vpack.c.bf16 %v241, %v235
    %v338 = vld [vmem:[#allocation4] sm:$0x3f]
    %v340 = vperm.slane %v338, 0
    %v341 = vperm.slane %v338, 1
    %v342 = vperm.slane %v338, 2
    %v343 = vperm.slane %v338, 3
    %v344 = vperm.slane %v338, 4
    %v345 = vperm.slane %v338, 5
    %352 = vmatpush.bf16.msra.mxu0 %v284
    %353 = vmatpush.bf16.msra.mxu0 %v278
    %354 = vmatpush.bf16.msra.mxu0 %v272
    %355 = vmatpush.bf16.msra.mxu0 %v266
    %356 = vmatpush.bf16.msra.mxu0 %v260
    %357 = vmatpush.bf16.msra.mxu0 %v254
    %358 = vmatpush.bf16.msra.mxu0 %v248
    %359 = vmatpush.bf16.msra.mxu0 %v242
    %360 = vmatmul.bf16.gmra.mxu0 %v48
    %v361 = vpop.f32.mrf.mxu0
    %v362 = vadd.f32 %v340, %v361
    %v363 = vpop.f32.mrf.mxu0
    %v364 = vadd.f32 %v340, %v363
    %365 = vdwg.mxu0
    %366 = vmatpush.bf16.msra.mxu0 %v332
    %367 = vmatpush.bf16.msra.mxu0 %v326
    %368 = vmatpush.bf16.msra.mxu0 %v320
    %369 = vmatpush.bf16.msra.mxu0 %v314
    %370 = vmatpush.bf16.msra.mxu0 %v308
    %371 = vmatpush.bf16.msra.mxu0 %v302
    %372 = vmatpush.bf16.msra.mxu0 %v296
    %373 = vmatpush.bf16.msra.mxu0 %v290
    %374 = vmatmul.bf16.gmra.mxu0 %v49
    %v375 = vpop.f32.mrf.mxu0
    %v376 = vadd.f32 %v362, %v375
    %v377 = vpop.f32.mrf.mxu0
    %v378 = vadd.f32 %v364, %v377
    %379 = vdwg.mxu0
    %380 = vmatpush.bf16.msra.mxu0 %v285
    %381 = vmatpush.bf16.msra.mxu0 %v279
    %382 = vmatpush.bf16.msra.mxu0 %v273
    %383 = vmatpush.bf16.msra.mxu0 %v267
    %384 = vmatpush.bf16.msra.mxu0 %v261
    %385 = vmatpush.bf16.msra.mxu0 %v255
    %386 = vmatpush.bf16.msra.mxu0 %v249
    %387 = vmatpush.bf16.msra.mxu0 %v243
    %388 = vmatmul.bf16.gmra.mxu0 %v48
    %v389 = vpop.f32.mrf.mxu0
    %v390 = vadd.f32 %v341, %v389
    %v391 = vpop.f32.mrf.mxu0
    %v392 = vadd.f32 %v341, %v391
    %393 = vdwg.mxu0
    %394 = vmatpush.bf16.msra.mxu0 %v333
    %395 = vmatpush.bf16.msra.mxu0 %v327
    %396 = vmatpush.bf16.msra.mxu0 %v321
    %397 = vmatpush.bf16.msra.mxu0 %v315
    %398 = vmatpush.bf16.msra.mxu0 %v309
    %399 = vmatpush.bf16.msra.mxu0 %v303
    %400 = vmatpush.bf16.msra.mxu0 %v297
    %401 = vmatpush.bf16.msra.mxu0 %v291
    %402 = vmatmul.bf16.gmra.mxu0 %v49
    %v403 = vpop.f32.mrf.mxu0
    %v404 = vadd.f32 %v390, %v403
    %v405 = vpop.f32.mrf.mxu0
    %v406 = vadd.f32 %v392, %v405
    %407 = vdwg.mxu0
    %408 = vmatpush.bf16.msra.mxu0 %v286
    %409 = vmatpush.bf16.msra.mxu0 %v280
    %410 = vmatpush.bf16.msra.mxu0 %v274
    %411 = vmatpush.bf16.msra.mxu0 %v268
    %412 = vmatpush.bf16.msra.mxu0 %v262
    %413 = vmatpush.bf16.msra.mxu0 %v256
    %414 = vmatpush.bf16.msra.mxu0 %v250
    %415 = vmatpush.bf16.msra.mxu0 %v244
    %416 = vmatmul.bf16.gmra.mxu0 %v48
    %v417 = vpop.f32.mrf.mxu0
    %v418 = vadd.f32 %v342, %v417
    %v419 = vpop.f32.mrf.mxu0
    %v420 = vadd.f32 %v342, %v419
    %421 = vdwg.mxu0
    %422 = vmatpush.bf16.msra.mxu0 %v334
    %423 = vmatpush.bf16.msra.mxu0 %v328
    %424 = vmatpush.bf16.msra.mxu0 %v322
    %425 = vmatpush.bf16.msra.mxu0 %v316
    %426 = vmatpush.bf16.msra.mxu0 %v310
    %427 = vmatpush.bf16.msra.mxu0 %v304
    %428 = vmatpush.bf16.msra.mxu0 %v298
    %429 = vmatpush.bf16.msra.mxu0 %v292
    %430 = vmatmul.bf16.gmra.mxu0 %v49
    %v431 = vpop.f32.mrf.mxu0
    %v432 = vadd.f32 %v418, %v431
    %v433 = vpop.f32.mrf.mxu0
    %v434 = vadd.f32 %v420, %v433
    %435 = vdwg.mxu0
    %436 = vmatpush.bf16.msra.mxu0 %v287
    %437 = vmatpush.bf16.msra.mxu0 %v281
    %438 = vmatpush.bf16.msra.mxu0 %v275
    %439 = vmatpush.bf16.msra.mxu0 %v269
    %440 = vmatpush.bf16.msra.mxu0 %v263
    %441 = vmatpush.bf16.msra.mxu0 %v257
    %442 = vmatpush.bf16.msra.mxu0 %v251
    %443 = vmatpush.bf16.msra.mxu0 %v245
    %444 = vmatmul.bf16.gmra.mxu0 %v48
    %v445 = vpop.f32.mrf.mxu0
    %v446 = vadd.f32 %v343, %v445
    %v447 = vpop.f32.mrf.mxu0
    %v448 = vadd.f32 %v343, %v447
    %449 = vdwg.mxu0
    %450 = vmatpush.bf16.msra.mxu0 %v335
    %451 = vmatpush.bf16.msra.mxu0 %v329
    %452 = vmatpush.bf16.msra.mxu0 %v323
    %453 = vmatpush.bf16.msra.mxu0 %v317
    %454 = vmatpush.bf16.msra.mxu0 %v311
    %455 = vmatpush.bf16.msra.mxu0 %v305
    %456 = vmatpush.bf16.msra.mxu0 %v299
    %457 = vmatpush.bf16.msra.mxu0 %v293
    %458 = vmatmul.bf16.gmra.mxu0 %v49
    %v459 = vpop.f32.mrf.mxu0
    %v460 = vadd.f32 %v446, %v459
    %v461 = vpop.f32.mrf.mxu0
    %v462 = vadd.f32 %v448, %v461
    %463 = vdwg.mxu0
    %464 = vmatpush.bf16.msra.mxu0 %v288
    %465 = vmatpush.bf16.msra.mxu0 %v282
    %466 = vmatpush.bf16.msra.mxu0 %v276
    %467 = vmatpush.bf16.msra.mxu0 %v270
    %468 = vmatpush.bf16.msra.mxu0 %v264
    %469 = vmatpush.bf16.msra.mxu0 %v258
    %470 = vmatpush.bf16.msra.mxu0 %v252
    %471 = vmatpush.bf16.msra.mxu0 %v246
    %472 = vmatmul.bf16.gmra.mxu0 %v48
    %v473 = vpop.f32.mrf.mxu0
    %v474 = vadd.f32 %v344, %v473
    %v475 = vpop.f32.mrf.mxu0
    %v476 = vadd.f32 %v344, %v475
    %477 = vdwg.mxu0
    %478 = vmatpush.bf16.msra.mxu0 %v336
    %479 = vmatpush.bf16.msra.mxu0 %v330
    %480 = vmatpush.bf16.msra.mxu0 %v324
    %481 = vmatpush.bf16.msra.mxu0 %v318
    %482 = vmatpush.bf16.msra.mxu0 %v312
    %483 = vmatpush.bf16.msra.mxu0 %v306
    %484 = vmatpush.bf16.msra.mxu0 %v300
    %485 = vmatpush.bf16.msra.mxu0 %v294
    %486 = vmatmul.bf16.gmra.mxu0 %v49
    %v487 = vpop.f32.mrf.mxu0
    %v488 = vadd.f32 %v474, %v487
    %v489 = vpop.f32.mrf.mxu0
    %v490 = vadd.f32 %v476, %v489
    %491 = vdwg.mxu0
    %492 = vmatpush.bf16.msra.mxu0 %v289
    %493 = vmatpush.bf16.msra.mxu0 %v283
    %494 = vmatpush.bf16.msra.mxu0 %v277
    %495 = vmatpush.bf16.msra.mxu0 %v271
    %496 = vmatpush.bf16.msra.mxu0 %v265
    %497 = vmatpush.bf16.msra.mxu0 %v259
    %498 = vmatpush.bf16.msra.mxu0 %v253
    %499 = vmatpush.bf16.msra.mxu0 %v247
    %500 = vmatmul.bf16.gmra.mxu0 %v48
    %v501 = vpop.f32.mrf.mxu0
    %v502 = vadd.f32 %v345, %v501
    %v503 = vpop.f32.mrf.mxu0
    %v504 = vadd.f32 %v345, %v503
    %505 = vdwg.mxu0
    %506 = vmatpush.bf16.msra.mxu0 %v337
    %507 = vmatpush.bf16.msra.mxu0 %v331
    %508 = vmatpush.bf16.msra.mxu0 %v325
    %509 = vmatpush.bf16.msra.mxu0 %v319
    %510 = vmatpush.bf16.msra.mxu0 %v313
    %511 = vmatpush.bf16.msra.mxu0 %v307
    %512 = vmatpush.bf16.msra.mxu0 %v301
    %513 = vmatpush.bf16.msra.mxu0 %v295
    %514 = vmatmul.bf16.gmra.mxu0 %v49
    %v515 = vpop.f32.mrf.mxu0
    %v516 = vadd.f32 %v502, %v515
    %v517 = vpop.f32.mrf.mxu0
    %v518 = vadd.f32 %v504, %v517
    %519 = vdwg.mxu0
    %520 = vst [vmem:[%s3] sm:$0xff] %v376
    %521 = vst [vmem:[%s3 + $0x8] sm:$0xff] %v404
    %522 = vst [vmem:[%s3 + $0x10] sm:$0xff] %v432
    %523 = vst [vmem:[%s3 + $0x18] sm:$0xff] %v460
    %524 = vst [vmem:[%s3 + $0x20] sm:$0xff] %v488
    %525 = vst [vmem:[%s3 + $0x28] sm:$0xff] %v516
    %526 = vst [vmem:[%s3 + $0x30] sm:$0xff] %v378
    %527 = vst [vmem:[%s3 + $0x38] sm:$0xff] %v406
    %528 = vst [vmem:[%s3 + $0x40] sm:$0xff] %v434
    %529 = vst [vmem:[%s3 + $0x48] sm:$0xff] %v462
    %530 = vst [vmem:[%s3 + $0x50] sm:$0xff] %v490
    %531 = vst [vmem:[%s3 + $0x58] sm:$0xff] %v518
    // Predicated region
    $region22: #{hear_detector_forward.7} parent=1 // pred_check
      _
    $region23: #{hear_detector_forward.7} parent=1 // pred_check_branch
      %533 = sbr.rel (0) target = $region25
    $region24: #{hear_detector_forward.7} parent=1 // pred_region
      _
    $region25: #{hear_detector_forward.7} parent=1 // pred_fallthru
      _
    // Predicated region
    $region26: #{hear_detector_forward.7} parent=1 // pred_check
      _
    $region27: #{hear_detector_forward.7} parent=1 // pred_check_branch
      %535 = sbr.rel (0) target = $region29
    $region28: #{hear_detector_forward.7} parent=1 // pred_region
      _
    $region29: #{hear_detector_forward.7} parent=1 // pred_fallthru
      _
    %536 = vsyncpa [#allocation3], 1
    %537 = vsyncpa [#allocation5], 1

// kernel: hear_detector_forward.5
$region0: #{hear_detector_forward.5}
  #allocation0 [shape = 'u32[]', space=smem, size = 0x4, offset = 0x4, fixed_abs, tag = 'smem constant byte address 0x4 - core index']
  #allocation1 [shape = 'u32[72,128]{1,0:T(1,128)}', space=vmem, size = 0x9000, scoped, tag = 'internal scratch']
  %s0 = inlined_call_operand.vmem [shape: f32[16,512], index: 0, kind: input, shape index: {}]
  %s1 = inlined_call_operand.hbm [shape: f32[512,768], index: 1, kind: input, shape index: {}]
  %s2 = inlined_call_operand.hbm [shape: f32[1,768], index: 2, kind: input, shape index: {}]
  %s3 = inlined_call_operand.vmem [shape: f32[16,768], index: 3, kind: output, shape index: {}]
  %s4 = sld [smem:[#allocation0]]
  $region30: #{hear_detector_forward.5} parent=0
    _
  %s6 = ssub.s32 1, %s4
  %s7 = scalar_select 0, %s6, %s4
  $region1: #{hear_detector_forward.5} parent=0
    #allocation2 [shape = 'u8[1572864]{0}', space=vmem, size = 0x180000, scoped, tag = 'input window, operand 1, single buffered']
    #allocation3 [shape = 's32[1]{0}', space=sflag, size = 0x4, scoped, tag = 'scoped memory for hear_detector_forward.5']
    #allocation4 [shape = 'u8[3072]{0}', space=vmem, size = 0xc00, scoped, tag = 'input window, operand 2, single buffered']
    #allocation5 [shape = 's32[1]{0}', space=sflag, size = 0x4, scoped, tag = 'scoped memory for hear_detector_forward.5']
    %8 = vsyncpa [#allocation3], 0
    %9 = vsyncpa [#allocation5], 0
    // Predicated region
    $region2: #{hear_detector_forward.5} parent=1 // pred_check
      _
    $region3: #{hear_detector_forward.5} parent=1 // pred_check_branch
      %11 = sbr.rel (0) target = $region5
    $region4: #{hear_detector_forward.5} parent=1 // pred_region
      _
    $region5: #{hear_detector_forward.5} parent=1 // pred_fallthru
      _
    // Predicated region
    $region6: #{hear_detector_forward.5} parent=1 // pred_check
      _
    $region7: #{hear_detector_forward.5} parent=1 // pred_check_branch
      %13 = sbr.rel (0) target = $region9
    $region8: #{hear_detector_forward.5} parent=1 // pred_region
      %15 = vsyncadd [#allocation3], 0
      %s16 = sshll.u32 %s1, 4
      %s17 = int_to_ptr.hbm [resolvable:$true] %s16
      %s18 = sshll.u32 [#allocation2], 4
      %s19 = int_to_ptr.vmem [resolvable:$true] %s18
      %24 = dma.hbm_to_vmem [thread:$0]  %s17, 49152, %s19, [#allocation3], 768, 768, 48
    $region9: #{hear_detector_forward.5} parent=1 // pred_fallthru
      _
    // Predicated region
    $region10: #{hear_detector_forward.5} parent=1 // pred_check
      _
    $region11: #{hear_detector_forward.5} parent=1 // pred_check_branch
      %26 = sbr.rel (0) target = $region13
    $region12: #{hear_detector_forward.5} parent=1 // pred_region
      %28 = vsyncadd [#allocation5], 0
      %s30 = sshll.u32 %s2, 4
      %s31 = int_to_ptr.hbm [resolvable:$true] %s30
      %s32 = sshll.u32 [#allocation4], 4
      %s33 = int_to_ptr.vmem [resolvable:$true] %s32
      %35 = dma.hbm_to_vmem [thread:$0]  %s31, 96, %s33, [#allocation5]
    $region13: #{hear_detector_forward.5} parent=1 // pred_fallthru
      _
    // Predicated region
    $region14: #{hear_detector_forward.5} parent=1 // pred_check
      _
    $region15: #{hear_detector_forward.5} parent=1 // pred_check_branch
      %37 = sbr.rel (0) target = $region17
    $region16: #{hear_detector_forward.5} parent=1 // pred_region
      %39 = dma.done [#allocation3], 49152
    $region17: #{hear_detector_forward.5} parent=1 // pred_fallthru
      _
    // Predicated region
    $region18: #{hear_detector_forward.5} parent=1 // pred_check
      _
    $region19: #{hear_detector_forward.5} parent=1 // pred_check_branch
      %41 = sbr.rel (0) target = $region21
    $region20: #{hear_detector_forward.5} parent=1 // pred_region
      %43 = dma.done [#allocation5], 96
    $region21: #{hear_detector_forward.5} parent=1 // pred_fallthru
      _
    %v44 = vld [vmem:[%s0] sm:$0xff]
    %v45 = vld [vmem:[%s0 + $0x8] sm:$0xff]
    %v46 = vld [vmem:[%s0 + $0x10] sm:$0xff]
    %v47 = vld [vmem:[%s0 + $0x18] sm:$0xff]
    %v48 = vld [vmem:[%s0 + $0x20] sm:$0xff]
    %v49 = vld [vmem:[%s0 + $0x28] sm:$0xff]
    %v50 = vld [vmem:[%s0 + $0x30] sm:$0xff]
    %v51 = vld [vmem:[%s0 + $0x38] sm:$0xff]
    %v52 = vpack.c.bf16 %v48, %v44
    %v53 = vpack.c.bf16 %v49, %v45
    %v54 = vpack.c.bf16 %v50, %v46
    %v55 = vpack.c.bf16 %v51, %v47
    %v56 = vld [vmem:[#allocation2] sm:$0xff]
    %v57 = vld [vmem:[#allocation2 + $0x8] sm:$0xff]
    %v58 = vld [vmem:[#allocation2 + $0x10] sm:$0xff]
    %v59 = vld [vmem:[#allocation2 + $0x18] sm:$0xff]
    %v60 = vld [vmem:[#allocation2 + $0x20] sm:$0xff]
    %v61 = vld [vmem:[#allocation2 + $0x28] sm:$0xff]
    %v62 = vld [vmem:[#allocation2 + $0x30] sm:$0xff]
    %v63 = vld [vmem:[#allocation2 + $0x38] sm:$0xff]
    %v64 = vld [vmem:[#allocation2 + $0x40] sm:$0xff]
    %v65 = vld [vmem:[#allocation2 + $0x48] sm:$0xff]
    %v66 = vld [vmem:[#allocation2 + $0x50] sm:$0xff]
    %v67 = vld [vmem:[#allocation2 + $0x58] sm:$0xff]
    %v68 = vld [vmem:[#allocation2 + $0x60] sm:$0xff]
    %v69 = vld [vmem:[#allocation2 + $0x68] sm:$0xff]
    %v70 = vld [vmem:[#allocation2 + $0x70] sm:$0xff]
    %v71 = vld [vmem:[#allocation2 + $0x78] sm:$0xff]
    %v72 = vld [vmem:[#allocation2 + $0x80] sm:$0xff]
    %v73 = vld [vmem:[#allocation2 + $0x88] sm:$0xff]
    %v74 = vld [vmem:[#allocation2 + $0x90] sm:$0xff]
    %v75 = vld [vmem:[#allocation2 + $0x98] sm:$0xff]
    %v76 = vld [vmem:[#allocation2 + $0xa0] sm:$0xff]
    %v77 = vld [vmem:[#allocation2 + $0xa8] sm:$0xff]
    %v78 = vld [vmem:[#allocation2 + $0xb0] sm:$0xff]
    %v79 = vld [vmem:[#allocation2 + $0xb8] sm:$0xff]
    %v80 = vld [vmem:[#allocation2 + $0xc0] sm:$0xff]
    %v81 = vld [vmem:[#allocation2 + $0xc8] sm:$0xff]
    %v82 = vld [vmem:[#allocation2 + $0xd0] sm:$0xff]
    %v83 = vld [vmem:[#allocation2 + $0xd8] sm:$0xff]
    %v84 = vld [vmem:[#allocation2 + $0xe0] sm:$0xff]
    %v85 = vld [vmem:[#allocation2 + $0xe8] sm:$0xff]
    %v86 = vld [vmem:[#allocation2 + $0xf0] sm:$0xff]
    %v87 = vld [vmem:[#allocation2 + $0xf8] sm:$0xff]
    %v88 = vld [vmem:[#allocation2 + $0x100] sm:$0xff]
    %v89 = vld [vmem:[#allocation2 + $0x108] sm:$0xff]
    %v90 = vld [vmem:[#allocation2 + $0x110] sm:$0xff]
    %v91 = vld [vmem:[#allocation2 + $0x118] sm:$0xff]
    %v92 = vld [vmem:[#allocation2 + $0x120] sm:$0xff]
    %v93 = vld [vmem:[#allocation2 + $0x128] sm:$0xff]
    %v94 = vld [vmem:[#allocation2 + $0x130] sm:$0xff]
    %v95 = vld [vmem:[#allocation2 + $0x138] sm:$0xff]
    %v96 = vld [vmem:[#allocation2 + $0x140] sm:$0xff]
    %v97 = vld [vmem:[#allocation2 + $0x148] sm:$0xff]
    %v98 = vld [vmem:[#allocation2 + $0x150] sm:$0xff]
    %v99 = vld [vmem:[#allocation2 + $0x158] sm:$0xff]
    %v100 = vld [vmem:[#allocation2 + $0x160] sm:$0xff]
    %v101 = vld [vmem:[#allocation2 + $0x168] sm:$0xff]
    %v102 = vld [vmem:[#allocation2 + $0x170] sm:$0xff]
    %v103 = vld [vmem:[#allocation2 + $0x178] sm:$0xff]
    %v104 = vld [vmem:[#allocation2 + $0x180] sm:$0xff]
    %v105 = vld [vmem:[#allocation2 + $0x188] sm:$0xff]
    %v106 = vld [vmem:[#allocation2 + $0x190] sm:$0xff]
    %v107 = vld [vmem:[#allocation2 + $0x198] sm:$0xff]
    %v108 = vld [vmem:[#allocation2 + $0x1a0] sm:$0xff]
    %v109 = vld [vmem:[#allocation2 + $0x1a8] sm:$0xff]
    %v110 = vld [vmem:[#allocation2 + $0x1b0] sm:$0xff]
    %v111 = vld [vmem:[#allocation2 + $0x1b8] sm:$0xff]
    %v112 = vld [vmem:[#allocation2 + $0x1c0] sm:$0xff]
    %v113 = vld [vmem:[#allocation2 + $0x1c8] sm:$0xff]
    %v114 = vld [vmem:[#allocation2 + $0x1d0] sm:$0xff]
    %v115 = vld [vmem:[#allocation2 + $0x1d8] sm:$0xff]
    %v116 = vld [vmem:[#allocation2 + $0x1e0] sm:$0xff]
    %v117 = vld [vmem:[#allocation2 + $0x1e8] sm:$0xff]
    %v118 = vld [vmem:[#allocation2 + $0x1f0] sm:$0xff]
    %v119 = vld [vmem:[#allocation2 + $0x1f8] sm:$0xff]
    %v120 = vld [vmem:[#allocation2 + $0x200] sm:$0xff]
    %v121 = vld [vmem:[#allocation2 + $0x208] sm:$0xff]
    %v122 = vld [vmem:[#allocation2 + $0x210] sm:$0xff]
    %v123 = vld [vmem:[#allocation2 + $0x218] sm:$0xff]
    %v124 = vld [vmem:[#allocation2 + $0x220] sm:$0xff]
    %v125 = vld [vmem:[#allocation2 + $0x228] sm:$0xff]
    %v126 = vld [vmem:[#allocation2 + $0x230] sm:$0xff]
    %v127 = vld [vmem:[#allocation2 + $0x238] sm:$0xff]
    %v128 = vld [vmem:[#allocation2 + $0x240] sm:$0xff]
    %v129 = vld [vmem:[#allocation2 + $0x248] sm:$0xff]
    %v130 = vld [vmem:[#allocation2 + $0x250] sm:$0xff]
    %v131 = vld [vmem:[#allocation2 + $0x258] sm:$0xff]
    %v132 = vld [vmem:[#allocation2 + $0x260] sm:$0xff]
    %v133 = vld [vmem:[#allocation2 + $0x268] sm:$0xff]
    %v134 = vld [vmem:[#allocation2 + $0x270] sm:$0xff]
    %v135 = vld [vmem:[#allocation2 + $0x278] sm:$0xff]
    %v136 = vld [vmem:[#allocation2 + $0x280] sm:$0xff]
    %v137 = vld [vmem:[#allocation2 + $0x288] sm:$0xff]
    %v138 = vld [vmem:[#allocation2 + $0x290] sm:$0xff]
    %v139 = vld [vmem:[#allocation2 + $0x298] sm:$0xff]
    %v140 = vld [vmem:[#allocation2 + $0x2a0] sm:$0xff]
    %v141 = vld [vmem:[#allocation2 + $0x2a8] sm:$0xff]
    %v142 = vld [vmem:[#allocation2 + $0x2b0] sm:$0xff]
    %v143 = vld [vmem:[#allocation2 + $0x2b8] sm:$0xff]
    %v144 = vld [vmem:[#allocation2 + $0x2c0] sm:$0xff]
    %v145 = vld [vmem:[#allocation2 + $0x2c8] sm:$0xff]
    %v146 = vld [vmem:[#allocation2 + $0x2d0] sm:$0xff]
    %v147 = vld [vmem:[#allocation2 + $0x2d8] sm:$0xff]
    %v148 = vld [vmem:[#allocation2 + $0x2e0] sm:$0xff]
    %v149 = vld [vmem:[#allocation2 + $0x2e8] sm:$0xff]
    %v150 = vld [vmem:[#allocation2 + $0x2f0] sm:$0xff]
    %v151 = vld [vmem:[#allocation2 + $0x2f8] sm:$0xff]
    %v152 = vld [vmem:[#allocation2 + $0x300] sm:$0xff]
    %v153 = vld [vmem:[#allocation2 + $0x308] sm:$0xff]
    %v154 = vld [vmem:[#allocation2 + $0x310] sm:$0xff]
    %v155 = vld [vmem:[#allocation2 + $0x318] sm:$0xff]
    %v156 = vld [vmem:[#allocation2 + $0x320] sm:$0xff]
    %v157 = vld [vmem:[#allocation2 + $0x328] sm:$0xff]
    %v158 = vld [vmem:[#allocation2 + $0x330] sm:$0xff]
    %v159 = vld [vmem:[#allocation2 + $0x338] sm:$0xff]
    %v160 = vld [vmem:[#allocation2 + $0x340] sm:$0xff]
    %v161 = vld [vmem:[#allocation2 + $0x348] sm:$0xff]
    %v162 = vld [vmem:[#allocation2 + $0x350] sm:$0xff]
    %v163 = vld [vmem:[#allocation2 + $0x358] sm:$0xff]
    %v164 = vld [vmem:[#allocation2 + $0x360] sm:$0xff]
    %v165 = vld [vmem:[#allocation2 + $0x368] sm:$0xff]
    %v166 = vld [vmem:[#allocation2 + $0x370] sm:$0xff]
    %v167 = vld [vmem:[#allocation2 + $0x378] sm:$0xff]
    %v168 = vld [vmem:[#allocation2 + $0x380] sm:$0xff]
    %v169 = vld [vmem:[#allocation2 + $0x388] sm:$0xff]
    %v170 = vld [vmem:[#allocation2 + $0x390] sm:$0xff]
    %v171 = vld [vmem:[#allocation2 + $0x398] sm:$0xff]
    %v172 = vld [vmem:[#allocation2 + $0x3a0] sm:$0xff]
    %v173 = vld [vmem:[#allocation2 + $0x3a8] sm:$0xff]
    %v174 = vld [vmem:[#allocation2 + $0x3b0] sm:$0xff]
    %v175 = vld [vmem:[#allocation2 + $0x3b8] sm:$0xff]
    %v176 = vld [vmem:[#allocation2 + $0x3c0] sm:$0xff]
    %v177 = vld [vmem:[#allocation2 + $0x3c8] sm:$0xff]
    %v178 = vld [vmem:[#allocation2 + $0x3d0] sm:$0xff]
    %v179 = vld [vmem:[#allocation2 + $0x3d8] sm:$0xff]
    %v180 = vld [vmem:[#allocation2 + $0x3e0] sm:$0xff]
    %v181 = vld [vmem:[#allocation2 + $0x3e8] sm:$0xff]
    %v182 = vld [vmem:[#allocation2 + $0x3f0] sm:$0xff]
    %v183 = vld [vmem:[#allocation2 + $0x3f8] sm:$0xff]
    %v184 = vld [vmem:[#allocation2 + $0x400] sm:$0xff]
    %v185 = vld [vmem:[#allocation2 + $0x408] sm:$0xff]
    %v186 = vld [vmem:[#allocation2 + $0x410] sm:$0xff]
    %v187 = vld [vmem:[#allocation2 + $0x418] sm:$0xff]
    %v188 = vld [vmem:[#allocation2 + $0x420] sm:$0xff]
    %v189 = vld [vmem:[#allocation2 + $0x428] sm:$0xff]
    %v190 = vld [vmem:[#allocation2 + $0x430] sm:$0xff]
    %v191 = vld [vmem:[#allocation2 + $0x438] sm:$0xff]
    %v192 = vld [vmem:[#allocation2 + $0x440] sm:$0xff]
    %v193 = vld [vmem:[#allocation2 + $0x448] sm:$0xff]
    %v194 = vld [vmem:[#allocation2 + $0x450] sm:$0xff]
    %v195 = vld [vmem:[#allocation2 + $0x458] sm:$0xff]
    %v196 = vld [vmem:[#allocation2 + $0x460] sm:$0xff]
    %v197 = vld [vmem:[#allocation2 + $0x468] sm:$0xff]
    %v198 = vld [vmem:[#allocation2 + $0x470] sm:$0xff]
    %v199 = vld [vmem:[#allocation2 + $0x478] sm:$0xff]
    %v200 = vld [vmem:[#allocation2 + $0x480] sm:$0xff]
    %v201 = vld [vmem:[#allocation2 + $0x488] sm:$0xff]
    %v202 = vld [vmem:[#allocation2 + $0x490] sm:$0xff]
    %v203 = vld [vmem:[#allocation2 + $0x498] sm:$0xff]
    %v204 = vld [vmem:[#allocation2 + $0x4a0] sm:$0xff]
    %v205 = vld [vmem:[#allocation2 + $0x4a8] sm:$0xff]
    %v206 = vld [vmem:[#allocation2 + $0x4b0] sm:$0xff]
    %v207 = vld [vmem:[#allocation2 + $0x4b8] sm:$0xff]
    %v208 = vld [vmem:[#allocation2 + $0x4c0] sm:$0xff]
    %v209 = vld [vmem:[#allocation2 + $0x4c8] sm:$0xff]
    %v210 = vld [vmem:[#allocation2 + $0x4d0] sm:$0xff]
    %v211 = vld [vmem:[#allocation2 + $0x4d8] sm:$0xff]
    %v212 = vld [vmem:[#allocation2 + $0x4e0] sm:$0xff]
    %v213 = vld [vmem:[#allocation2 + $0x4e8] sm:$0xff]
    %v214 = vld [vmem:[#allocation2 + $0x4f0] sm:$0xff]
    %v215 = vld [vmem:[#allocation2 + $0x4f8] sm:$0xff]
    %v216 = vld [vmem:[#allocation2 + $0x500] sm:$0xff]
    %v217 = vld [vmem:[#allocation2 + $0x508] sm:$0xff]
    %v218 = vld [vmem:[#allocation2 + $0x510] sm:$0xff]
    %v219 = vld [vmem:[#allocation2 + $0x518] sm:$0xff]
    %v220 = vld [vmem:[#allocation2 + $0x520] sm:$0xff]
    %v221 = vld [vmem:[#allocation2 + $0x528] sm:$0xff]
    %v222 = vld [vmem:[#allocation2 + $0x530] sm:$0xff]
    %v223 = vld [vmem:[#allocation2 + $0x538] sm:$0xff]
    %v224 = vld [vmem:[#allocation2 + $0x540] sm:$0xff]
    %v225 = vld [vmem:[#allocation2 + $0x548] sm:$0xff]
    %v226 = vld [vmem:[#allocation2 + $0x550] sm:$0xff]
    %v227 = vld [vmem:[#allocation2 + $0x558] sm:$0xff]
    %v228 = vld [vmem:[#allocation2 + $0x560] sm:$0xff]
    %v229 = vld [vmem:[#allocation2 + $0x568] sm:$0xff]
    %v230 = vld [vmem:[#allocation2 + $0x570] sm:$0xff]
    %v231 = vld [vmem:[#allocation2 + $0x578] sm:$0xff]
    %v232 = vld [vmem:[#allocation2 + $0x580] sm:$0xff]
    %v233 = vld [vmem:[#allocation2 + $0x588] sm:$0xff]
    %v234 = vld [vmem:[#allocation2 + $0x590] sm:$0xff]
    %v235 = vld [vmem:[#allocation2 + $0x598] sm:$0xff]
    %v236 = vld [vmem:[#allocation2 + $0x5a0] sm:$0xff]
    %v237 = vld [vmem:[#allocation2 + $0x5a8] sm:$0xff]
    %v238 = vld [vmem:[#allocation2 + $0x5b0] sm:$0xff]
    %v239 = vld [vmem:[#allocation2 + $0x5b8] sm:$0xff]
    %v240 = vld [vmem:[#allocation2 + $0x5c0] sm:$0xff]
    %v241 = vld [vmem:[#allocation2 + $0x5c8] sm:$0xff]
    %v242 = vld [vmem:[#allocation2 + $0x5d0] sm:$0xff]
    %v243 = vld [vmem:[#allocation2 + $0x5d8] sm:$0xff]
    %v244 = vld [vmem:[#allocation2 + $0x5e0] sm:$0xff]
    %v245 = vld [vmem:[#allocation2 + $0x5e8] sm:$0xff]
    %v246 = vld [vmem:[#allocation2 + $0x5f0] sm:$0xff]
    %v247 = vld [vmem:[#allocation2 + $0x5f8] sm:$0xff]
    %v248 = vld [vmem:[#allocation2 + $0x600] sm:$0xff]
    %v249 = vld [vmem:[#allocation2 + $0x608] sm:$0xff]
    %v250 = vld [vmem:[#allocation2 + $0x610] sm:$0xff]
    %v251 = vld [vmem:[#allocation2 + $0x618] sm:$0xff]
    %v252 = vld [vmem:[#allocation2 + $0x620] sm:$0xff]
    %v253 = vld [vmem:[#allocation2 + $0x628] sm:$0xff]
    %v254 = vld [vmem:[#allocation2 + $0x630] sm:$0xff]
    %v255 = vld [vmem:[#allocation2 + $0x638] sm:$0xff]
    %v256 = vld [vmem:[#allocation2 + $0x640] sm:$0xff]
    %v257 = vld [vmem:[#allocation2 + $0x648] sm:$0xff]
    %v258 = vld [vmem:[#allocation2 + $0x650] sm:$0xff]
    %v259 = vld [vmem:[#allocation2 + $0x658] sm:$0xff]
    %v260 = vld [vmem:[#allocation2 + $0x660] sm:$0xff]
    %v261 = vld [vmem:[#allocation2 + $0x668] sm:$0xff]
    %v262 = vld [vmem:[#allocation2 + $0x670] sm:$0xff]
    %v263 = vld [vmem:[#allocation2 + $0x678] sm:$0xff]
    %v264 = vld [vmem:[#allocation2 + $0x680] sm:$0xff]
    %v265 = vld [vmem:[#allocation2 + $0x688] sm:$0xff]
    %v266 = vld [vmem:[#allocation2 + $0x690] sm:$0xff]
    %v267 = vld [vmem:[#allocation2 + $0x698] sm:$0xff]
    %v268 = vld [vmem:[#allocation2 + $0x6a0] sm:$0xff]
    %v269 = vld [vmem:[#allocation2 + $0x6a8] sm:$0xff]
    %v270 = vld [vmem:[#allocation2 + $0x6b0] sm:$0xff]
    %v271 = vld [vmem:[#allocation2 + $0x6b8] sm:$0xff]
    %v272 = vld [vmem:[#allocation2 + $0x6c0] sm:$0xff]
    %v273 = vld [vmem:[#allocation2 + $0x6c8] sm:$0xff]
    %v274 = vld [vmem:[#allocation2 + $0x6d0] sm:$0xff]
    %v275 = vld [vmem:[#allocation2 + $0x6d8] sm:$0xff]
    %v276 = vld [vmem:[#allocation2 + $0x6e0] sm:$0xff]
    %v277 = vld [vmem:[#allocation2 + $0x6e8] sm:$0xff]
    %v278 = vld [vmem:[#allocation2 + $0x6f0] sm:$0xff]
    %v279 = vld [vmem:[#allocation2 + $0x6f8] sm:$0xff]
    %v280 = vld [vmem:[#allocation2 + $0x700] sm:$0xff]
    %v281 = vld [vmem:[#allocation2 + $0x708] sm:$0xff]
    %v282 = vld [vmem:[#allocation2 + $0x710] sm:$0xff]
    %v283 = vld [vmem:[#allocation2 + $0x718] sm:$0xff]
    %v284 = vld [vmem:[#allocation2 + $0x720] sm:$0xff]
    %v285 = vld [vmem:[#allocation2 + $0x728] sm:$0xff]
    %v286 = vld [vmem:[#allocation2 + $0x730] sm:$0xff]
    %v287 = vld [vmem:[#allocation2 + $0x738] sm:$0xff]
    %v288 = vld [vmem:[#allocation2 + $0x740] sm:$0xff]
    %v289 = vld [vmem:[#allocation2 + $0x748] sm:$0xff]
    %v290 = vld [vmem:[#allocation2 + $0x750] sm:$0xff]
    %v291 = vld [vmem:[#allocation2 + $0x758] sm:$0xff]
    %v292 = vld [vmem:[#allocation2 + $0x760] sm:$0xff]
    %v293 = vld [vmem:[#allocation2 + $0x768] sm:$0xff]
    %v294 = vld [vmem:[#allocation2 + $0x770] sm:$0xff]
    %v295 = vld [vmem:[#allocation2 + $0x778] sm:$0xff]
    %v296 = vld [vmem:[#allocation2 + $0x780] sm:$0xff]
    %v297 = vld [vmem:[#allocation2 + $0x788] sm:$0xff]
    %v298 = vld [vmem:[#allocation2 + $0x790] sm:$0xff]
    %v299 = vld [vmem:[#allocation2 + $0x798] sm:$0xff]
    %v300 = vld [vmem:[#allocation2 + $0x7a0] sm:$0xff]
    %v301 = vld [vmem:[#allocation2 + $0x7a8] sm:$0xff]
    %v302 = vld [vmem:[#allocation2 + $0x7b0] sm:$0xff]
    %v303 = vld [vmem:[#allocation2 + $0x7b8] sm:$0xff]
    %v304 = vld [vmem:[#allocation2 + $0x7c0] sm:$0xff]
    %v305 = vld [vmem:[#allocation2 + $0x7c8] sm:$0xff]
    %v306 = vld [vmem:[#allocation2 + $0x7d0] sm:$0xff]
    %v307 = vld [vmem:[#allocation2 + $0x7d8] sm:$0xff]
    %v308 = vld [vmem:[#allocation2 + $0x7e0] sm:$0xff]
    %v309 = vld [vmem:[#allocation2 + $0x7e8] sm:$0xff]
    %v310 = vld [vmem:[#allocation2 + $0x7f0] sm:$0xff]
    %v311 = vld [vmem:[#allocation2 + $0x7f8] sm:$0xff]
    %v312 = vld [vmem:[#allocation2 + $0x800] sm:$0xff]
    %v313 = vld [vmem:[#allocation2 + $0x808] sm:$0xff]
    %v314 = vld [vmem:[#allocation2 + $0x810] sm:$0xff]
    %v315 = vld [vmem:[#allocation2 + $0x818] sm:$0xff]
    %v316 = vld [vmem:[#allocation2 + $0x820] sm:$0xff]
    %v317 = vld [vmem:[#allocation2 + $0x828] sm:$0xff]
    %v318 = vld [vmem:[#allocation2 + $0x830] sm:$0xff]
    %v319 = vld [vmem:[#allocation2 + $0x838] sm:$0xff]
    %v320 = vld [vmem:[#allocation2 + $0x840] sm:$0xff]
    %v321 = vld [vmem:[#allocation2 + $0x848] sm:$0xff]
    %v322 = vld [vmem:[#allocation2 + $0x850] sm:$0xff]
    %v323 = vld [vmem:[#allocation2 + $0x858] sm:$0xff]
    %v324 = vld [vmem:[#allocation2 + $0x860] sm:$0xff]
    %v325 = vld [vmem:[#allocation2 + $0x868] sm:$0xff]
    %v326 = vld [vmem:[#allocation2 + $0x870] sm:$0xff]
    %v327 = vld [vmem:[#allocation2 + $0x878] sm:$0xff]
    %v328 = vld [vmem:[#allocation2 + $0x880] sm:$0xff]
    %v329 = vld [vmem:[#allocation2 + $0x888] sm:$0xff]
    %v330 = vld [vmem:[#allocation2 + $0x890] sm:$0xff]
    %v331 = vld [vmem:[#allocation2 + $0x898] sm:$0xff]
    %v332 = vld [vmem:[#allocation2 + $0x8a0] sm:$0xff]
    %v333 = vld [vmem:[#allocation2 + $0x8a8] sm:$0xff]
    %v334 = vld [vmem:[#allocation2 + $0x8b0] sm:$0xff]
    %v335 = vld [vmem:[#allocation2 + $0x8b8] sm:$0xff]
    %v336 = vld [vmem:[#allocation2 + $0x8c0] sm:$0xff]
    %v337 = vld [vmem:[#allocation2 + $0x8c8] sm:$0xff]
    %v338 = vld [vmem:[#allocation2 + $0x8d0] sm:$0xff]
    %v339 = vld [vmem:[#allocation2 + $0x8d8] sm:$0xff]
    %v340 = vld [vmem:[#allocation2 + $0x8e0] sm:$0xff]
    %v341 = vld [vmem:[#allocation2 + $0x8e8] sm:$0xff]
    %v342 = vld [vmem:[#allocation2 + $0x8f0] sm:$0xff]
    %v343 = vld [vmem:[#allocation2 + $0x8f8] sm:$0xff]
    %v344 = vld [vmem:[#allocation2 + $0x900] sm:$0xff]
    %v345 = vld [vmem:[#allocation2 + $0x908] sm:$0xff]
    %v346 = vld [vmem:[#allocation2 + $0x910] sm:$0xff]
    %v347 = vld [vmem:[#allocation2 + $0x918] sm:$0xff]
    %v348 = vld [vmem:[#allocation2 + $0x920] sm:$0xff]
    %v349 = vld [vmem:[#allocation2 + $0x928] sm:$0xff]
    %v350 = vld [vmem:[#allocation2 + $0x930] sm:$0xff]
    %v351 = vld [vmem:[#allocation2 + $0x938] sm:$0xff]
    %v352 = vld [vmem:[#allocation2 + $0x940] sm:$0xff]
    %v353 = vld [vmem:[#allocation2 + $0x948] sm:$0xff]
    %v354 = vld [vmem:[#allocation2 + $0x950] sm:$0xff]
    %v355 = vld [vmem:[#allocation2 + $0x958] sm:$0xff]
    %v356 = vld [vmem:[#allocation2 + $0x960] sm:$0xff]
    %v357 = vld [vmem:[#allocation2 + $0x968] sm:$0xff]
    %v358 = vld [vmem:[#allocation2 + $0x970] sm:$0xff]
    %v359 = vld [vmem:[#allocation2 + $0x978] sm:$0xff]
    %v360 = vld [vmem:[#allocation2 + $0x980] sm:$0xff]
    %v361 = vld [vmem:[#allocation2 + $0x988] sm:$0xff]
    %v362 = vld [vmem:[#allocation2 + $0x990] sm:$0xff]
    %v363 = vld [vmem:[#allocation2 + $0x998] sm:$0xff]
    %v364 = vld [vmem:[#allocation2 + $0x9a0] sm:$0xff]
    %v365 = vld [vmem:[#allocation2 + $0x9a8] sm:$0xff]
    %v366 = vld [vmem:[#allocation2 + $0x9b0] sm:$0xff]
    %v367 = vld [vmem:[#allocation2 + $0x9b8] sm:$0xff]
    %v368 = vld [vmem:[#allocation2 + $0x9c0] sm:$0xff]
    %v369 = vld [vmem:[#allocation2 + $0x9c8] sm:$0xff]
    %v370 = vld [vmem:[#allocation2 + $0x9d0] sm:$0xff]
    %v371 = vld [vmem:[#allocation2 + $0x9d8] sm:$0xff]
    %v372 = vld [vmem:[#allocation2 + $0x9e0] sm:$0xff]
    %v373 = vld [vmem:[#allocation2 + $0x9e8] sm:$0xff]
    %v374 = vld [vmem:[#allocation2 + $0x9f0] sm:$0xff]
    %v375 = vld [vmem:[#allocation2 + $0x9f8] sm:$0xff]
    %v376 = vld [vmem:[#allocation2 + $0xa00] sm:$0xff]
    %v377 = vld [vmem:[#allocation2 + $0xa08] sm:$0xff]
    %v378 = vld [vmem:[#allocation2 + $0xa10] sm:$0xff]
    %v379 = vld [vmem:[#allocation2 + $0xa18] sm:$0xff]
    %v380 = vld [vmem:[#allocation2 + $0xa20] sm:$0xff]
    %v381 = vld [vmem:[#allocation2 + $0xa28] sm:$0xff]
    %v382 = vld [vmem:[#allocation2 + $0xa30] sm:$0xff]
    %v383 = vld [vmem:[#allocation2 + $0xa38] sm:$0xff]
    %v384 = vld [vmem:[#allocation2 + $0xa40] sm:$0xff]
    %v385 = vld [vmem:[#allocation2 + $0xa48] sm:$0xff]
    %v386 = vld [vmem:[#allocation2 + $0xa50] sm:$0xff]
    %v387 = vld [vmem:[#allocation2 + $0xa58] sm:$0xff]
    %v388 = vld [vmem:[#allocation2 + $0xa60] sm:$0xff]
    %v389 = vld [vmem:[#allocation2 + $0xa68] sm:$0xff]
    %v390 = vld [vmem:[#allocation2 + $0xa70] sm:$0xff]
    %v391 = vld [vmem:[#allocation2 + $0xa78] sm:$0xff]
    %v392 = vld [vmem:[#allocation2 + $0xa80] sm:$0xff]
    %v393 = vld [vmem:[#allocation2 + $0xa88] sm:$0xff]
    %v394 = vld [vmem:[#allocation2 + $0xa90] sm:$0xff]
    %v395 = vld [vmem:[#allocation2 + $0xa98] sm:$0xff]
    %v396 = vld [vmem:[#allocation2 + $0xaa0] sm:$0xff]
    %v397 = vld [vmem:[#allocation2 + $0xaa8] sm:$0xff]
    %v398 = vld [vmem:[#allocation2 + $0xab0] sm:$0xff]
    %v399 = vld [vmem:[#allocation2 + $0xab8] sm:$0xff]
    %v400 = vld [vmem:[#allocation2 + $0xac0] sm:$0xff]
    %v401 = vld [vmem:[#allocation2 + $0xac8] sm:$0xff]
    %v402 = vld [vmem:[#allocation2 + $0xad0] sm:$0xff]
    %v403 = vld [vmem:[#allocation2 + $0xad8] sm:$0xff]
    %v404 = vld [vmem:[#allocation2 + $0xae0] sm:$0xff]
    %v405 = vld [vmem:[#allocation2 + $0xae8] sm:$0xff]
    %v406 = vld [vmem:[#allocation2 + $0xaf0] sm:$0xff]
    %v407 = vld [vmem:[#allocation2 + $0xaf8] sm:$0xff]
    %v408 = vld [vmem:[#allocation2 + $0xb00] sm:$0xff]
    %v409 = vld [vmem:[#allocation2 + $0xb08] sm:$0xff]
    %v410 = vld [vmem:[#allocation2 + $0xb10] sm:$0xff]
    %v411 = vld [vmem:[#allocation2 + $0xb18] sm:$0xff]
    %v412 = vld [vmem:[#allocation2 + $0xb20] sm:$0xff]
    %v413 = vld [vmem:[#allocation2 + $0xb28] sm:$0xff]
    %v414 = vld [vmem:[#allocation2 + $0xb30] sm:$0xff]
    %v415 = vld [vmem:[#allocation2 + $0xb38] sm:$0xff]
    %v416 = vld [vmem:[#allocation2 + $0xb40] sm:$0xff]
    %v417 = vld [vmem:[#allocation2 + $0xb48] sm:$0xff]
    %v418 = vld [vmem:[#allocation2 + $0xb50] sm:$0xff]
    %v419 = vld [vmem:[#allocation2 + $0xb58] sm:$0xff]
    %v420 = vld [vmem:[#allocation2 + $0xb60] sm:$0xff]
    %v421 = vld [vmem:[#allocation2 + $0xb68] sm:$0xff]
    %v422 = vld [vmem:[#allocation2 + $0xb70] sm:$0xff]
    %v423 = vld [vmem:[#allocation2 + $0xb78] sm:$0xff]
    %v424 = vld [vmem:[#allocation2 + $0xb80] sm:$0xff]
    %v425 = vld [vmem:[#allocation2 + $0xb88] sm:$0xff]
    %v426 = vld [vmem:[#allocation2 + $0xb90] sm:$0xff]
    %v427 = vld [vmem:[#allocation2 + $0xb98] sm:$0xff]
    %v428 = vld [vmem:[#allocation2 + $0xba0] sm:$0xff]
    %v429 = vld [vmem:[#allocation2 + $0xba8] sm:$0xff]
    %v430 = vld [vmem:[#allocation2 + $0xbb0] sm:$0xff]
    %v431 = vld [vmem:[#allocation2 + $0xbb8] sm:$0xff]
    %v432 = vld [vmem:[#allocation2 + $0xbc0] sm:$0xff]
    %v433 = vld [vmem:[#allocation2 + $0xbc8] sm:$0xff]
    %v434 = vld [vmem:[#allocation2 + $0xbd0] sm:$0xff]
    %v435 = vld [vmem:[#allocation2 + $0xbd8] sm:$0xff]
    %v436 = vld [vmem:[#allocation2 + $0xbe0] sm:$0xff]
    %v437 = vld [vmem:[#allocation2 + $0xbe8] sm:$0xff]
    %v438 = vld [vmem:[#allocation2 + $0xbf0] sm:$0xff]
    %v439 = vld [vmem:[#allocation2 + $0xbf8] sm:$0xff]
    %v440 = vpack.c.bf16 %v62, %v56
    %v441 = vpack.c.bf16 %v63, %v57
    %v442 = vpack.c.bf16 %v64, %v58
    %v443 = vpack.c.bf16 %v65, %v59
    %v444 = vpack.c.bf16 %v66, %v60
    %v445 = vpack.c.bf16 %v67, %v61
    %v446 = vpack.c.bf16 %v74, %v68
    %v447 = vpack.c.bf16 %v75, %v69
    %v448 = vpack.c.bf16 %v76, %v70
    %v449 = vpack.c.bf16 %v77, %v71
    %v450 = vpack.c.bf16 %v78, %v72
    %v451 = vpack.c.bf16 %v79, %v73
    %v452 = vpack.c.bf16 %v86, %v80
    %v453 = vpack.c.bf16 %v87, %v81
    %v454 = vpack.c.bf16 %v88, %v82
    %v455 = vpack.c.bf16 %v89, %v83
    %v456 = vpack.c.bf16 %v90, %v84
    %v457 = vpack.c.bf16 %v91, %v85
    %v458 = vpack.c.bf16 %v98, %v92
    %v459 = vpack.c.bf16 %v99, %v93
    %v460 = vpack.c.bf16 %v100, %v94
    %v461 = vpack.c.bf16 %v101, %v95
    %v462 = vpack.c.bf16 %v102, %v96
    %v463 = vpack.c.bf16 %v103, %v97
    %v464 = vpack.c.bf16 %v110, %v104
    %v465 = vpack.c.bf16 %v111, %v105
    %v466 = vpack.c.bf16 %v112, %v106
    %v467 = vpack.c.bf16 %v113, %v107
    %v468 = vpack.c.bf16 %v114, %v108
    %v469 = vpack.c.bf16 %v115, %v109
    %v470 = vpack.c.bf16 %v122, %v116
    %v471 = vpack.c.bf16 %v123, %v117
    %v472 = vpack.c.bf16 %v124, %v118
    %v473 = vpack.c.bf16 %v125, %v119
    %v474 = vpack.c.bf16 %v126, %v120
    %v475 = vpack.c.bf16 %v127, %v121
    %v476 = vpack.c.bf16 %v134, %v128
    %v477 = vpack.c.bf16 %v135, %v129
    %v478 = vpack.c.bf16 %v136, %v130
    %v479 = vpack.c.bf16 %v137, %v131
    %v480 = vpack.c.bf16 %v138, %v132
    %v481 = vpack.c.bf16 %v139, %v133
    %v482 = vpack.c.bf16 %v146, %v140
    %v483 = vpack.c.bf16 %v147, %v141
    %v484 = vpack.c.bf16 %v148, %v142
    %v485 = vpack.c.bf16 %v149, %v143
    %v486 = vpack.c.bf16 %v150, %v144
    %v487 = vpack.c.bf16 %v151, %v145
    %v488 = vpack.c.bf16 %v158, %v152
    %v489 = vpack.c.bf16 %v159, %v153
    %v490 = vpack.c.bf16 %v160, %v154
    %v491 = vpack.c.bf16 %v161, %v155
    %v492 = vpack.c.bf16 %v162, %v156
    %v493 = vpack.c.bf16 %v163, %v157
    %v494 = vpack.c.bf16 %v170, %v164
    %v495 = vpack.c.bf16 %v171, %v165
    %v496 = vpack.c.bf16 %v172, %v166
    %v497 = vpack.c.bf16 %v173, %v167
    %v498 = vpack.c.bf16 %v174, %v168
    %v499 = vpack.c.bf16 %v175, %v169
    %v500 = vpack.c.bf16 %v182, %v176
    %v501 = vpack.c.bf16 %v183, %v177
    %v502 = vpack.c.bf16 %v184, %v178
    %v503 = vpack.c.bf16 %v185, %v179
    %v504 = vpack.c.bf16 %v186, %v180
    %v505 = vpack.c.bf16 %v187, %v181
    %v506 = vpack.c.bf16 %v194, %v188
    %v507 = vpack.c.bf16 %v195, %v189
    %v508 = vpack.c.bf16 %v196, %v190
    %v509 = vpack.c.bf16 %v197, %v191
    %v510 = vpack.c.bf16 %v198, %v192
    %v511 = vpack.c.bf16 %v199, %v193
    %v512 = vpack.c.bf16 %v206, %v200
    %v513 = vpack.c.bf16 %v207, %v201
    %v514 = vpack.c.bf16 %v208, %v202
    %v515 = vpack.c.bf16 %v209, %v203
    %v516 = vpack.c.bf16 %v210, %v204
    %v517 = vpack.c.bf16 %v211, %v205
    %v518 = vpack.c.bf16 %v218, %v212
    %v519 = vpack.c.bf16 %v219, %v213
    %v520 = vpack.c.bf16 %v220, %v214
    %v521 = vpack.c.bf16 %v221, %v215
    %v522 = vpack.c.bf16 %v222, %v216
    %v523 = vpack.c.bf16 %v223, %v217
    %v524 = vpack.c.bf16 %v230, %v224
    %v525 = vpack.c.bf16 %v231, %v225
    %v526 = vpack.c.bf16 %v232, %v226
    %v527 = vpack.c.bf16 %v233, %v227
    %v528 = vpack.c.bf16 %v234, %v228
    %v529 = vpack.c.bf16 %v235, %v229
    %v530 = vpack.c.bf16 %v242, %v236
    %v531 = vpack.c.bf16 %v243, %v237
    %v532 = vpack.c.bf16 %v244, %v238
    %v533 = vpack.c.bf16 %v245, %v239
    %v534 = vpack.c.bf16 %v246, %v240
    %v535 = vpack.c.bf16 %v247, %v241
    %v536 = vpack.c.bf16 %v254, %v248
    %v537 = vpack.c.bf16 %v255, %v249
    %v538 = vpack.c.bf16 %v256, %v250
    %v539 = vpack.c.bf16 %v257, %v251
    %v540 = vpack.c.bf16 %v258, %v252
    %v541 = vpack.c.bf16 %v259, %v253
    %v542 = vpack.c.bf16 %v266, %v260
    %v543 = vpack.c.bf16 %v267, %v261
    %v544 = vpack.c.bf16 %v268, %v262
    %v545 = vpack.c.bf16 %v269, %v263
    %v546 = vpack.c.bf16 %v270, %v264
    %v547 = vpack.c.bf16 %v271, %v265
    %v548 = vpack.c.bf16 %v278, %v272
    %v549 = vpack.c.bf16 %v279, %v273
    %v550 = vpack.c.bf16 %v280, %v274
    %v551 = vpack.c.bf16 %v281, %v275
    %v552 = vpack.c.bf16 %v282, %v276
    %v553 = vpack.c.bf16 %v283, %v277
    %v554 = vpack.c.bf16 %v290, %v284
    %v555 = vpack.c.bf16 %v291, %v285
    %v556 = vpack.c.bf16 %v292, %v286
    %v557 = vpack.c.bf16 %v293, %v287
    %v558 = vpack.c.bf16 %v294, %v288
    %v559 = vpack.c.bf16 %v295, %v289
    %v560 = vpack.c.bf16 %v302, %v296
    %v561 = vpack.c.bf16 %v303, %v297
    %v562 = vpack.c.bf16 %v304, %v298
    %v563 = vpack.c.bf16 %v305, %v299
    %v564 = vpack.c.bf16 %v306, %v300
    %v565 = vpack.c.bf16 %v307, %v301
    %v566 = vpack.c.bf16 %v314, %v308
    %v567 = vpack.c.bf16 %v315, %v309
    %v568 = vpack.c.bf16 %v316, %v310
    %v569 = vpack.c.bf16 %v317, %v311
    %v570 = vpack.c.bf16 %v318, %v312
    %v571 = vpack.c.bf16 %v319, %v313
    %v572 = vpack.c.bf16 %v326, %v320
    %v573 = vpack.c.bf16 %v327, %v321
    %v574 = vpack.c.bf16 %v328, %v322
    %v575 = vpack.c.bf16 %v329, %v323
    %v576 = vpack.c.bf16 %v330, %v324
    %v577 = vpack.c.bf16 %v331, %v325
    %v578 = vpack.c.bf16 %v338, %v332
    %v579 = vpack.c.bf16 %v339, %v333
    %v580 = vpack.c.bf16 %v340, %v334
    %v581 = vpack.c.bf16 %v341, %v335
    %v582 = vpack.c.bf16 %v342, %v336
    %v583 = vpack.c.bf16 %v343, %v337
    %v584 = vpack.c.bf16 %v350, %v344
    %v585 = vpack.c.bf16 %v351, %v345
    %v586 = vpack.c.bf16 %v352, %v346
    %v587 = vpack.c.bf16 %v353, %v347
    %v588 = vpack.c.bf16 %v354, %v348
    %v589 = vpack.c.bf16 %v355, %v349
    %v590 = vpack.c.bf16 %v362, %v356
    %v591 = vpack.c.bf16 %v363, %v357
    %v592 = vpack.c.bf16 %v364, %v358
    %v593 = vpack.c.bf16 %v365, %v359
    %v594 = vpack.c.bf16 %v366, %v360
    %v595 = vpack.c.bf16 %v367, %v361
    %v596 = vpack.c.bf16 %v374, %v368
    %v597 = vpack.c.bf16 %v375, %v369
    %v598 = vpack.c.bf16 %v376, %v370
    %v599 = vpack.c.bf16 %v377, %v371
    %v600 = vpack.c.bf16 %v378, %v372
    %v601 = vpack.c.bf16 %v379, %v373
    %v602 = vpack.c.bf16 %v386, %v380
    %v603 = vpack.c.bf16 %v387, %v381
    %v604 = vpack.c.bf16 %v388, %v382
    %v605 = vpack.c.bf16 %v389, %v383
    %v606 = vpack.c.bf16 %v390, %v384
    %v607 = vpack.c.bf16 %v391, %v385
    %v608 = vpack.c.bf16 %v398, %v392
    %v609 = vpack.c.bf16 %v399, %v393
    %v610 = vpack.c.bf16 %v400, %v394
    %v611 = vpack.c.bf16 %v401, %v395
    %v612 = vpack.c.bf16 %v402, %v396
    %v613 = vpack.c.bf16 %v403, %v397
    %v614 = vpack.c.bf16 %v410, %v404
    %v615 = vpack.c.bf16 %v411, %v405
    %v616 = vpack.c.bf16 %v412, %v406
    %v617 = vpack.c.bf16 %v413, %v407
    %v618 = vpack.c.bf16 %v414, %v408
    %v619 = vpack.c.bf16 %v415, %v409
    %v620 = vpack.c.bf16 %v422, %v416
    %v621 = vpack.c.bf16 %v423, %v417
    %v622 = vpack.c.bf16 %v424, %v418
    %v623 = vpack.c.bf16 %v425, %v419
    %v624 = vpack.c.bf16 %v426, %v420
    %v625 = vpack.c.bf16 %v427, %v421
    %v626 = vpack.c.bf16 %v434, %v428
    %v627 = vpack.c.bf16 %v435, %v429
    %v628 = vpack.c.bf16 %v436, %v430
    %v629 = vpack.c.bf16 %v437, %v431
    %v630 = vpack.c.bf16 %v438, %v432
    %v631 = vpack.c.bf16 %v439, %v433
    %v632 = vld [vmem:[#allocation4] sm:$0x3f]
    %v634 = vperm.slane %v632, 0
    %v635 = vperm.slane %v632, 1
    %v636 = vperm.slane %v632, 2
    %v637 = vperm.slane %v632, 3
    %v638 = vperm.slane %v632, 4
    %v639 = vperm.slane %v632, 5
    %646 = vmatpush.bf16.msra.mxu0 %v482
    %647 = vmatpush.bf16.msra.mxu0 %v476
    %648 = vmatpush.bf16.msra.mxu0 %v470
    %649 = vmatpush.bf16.msra.mxu0 %v464
    %650 = vmatpush.bf16.msra.mxu0 %v458
    %651 = vmatpush.bf16.msra.mxu0 %v452
    %652 = vmatpush.bf16.msra.mxu0 %v446
    %653 = vmatpush.bf16.msra.mxu0 %v440
    %654 = vmatmul.bf16.gmra.mxu0 %v52
    %v655 = vpop.f32.mrf.mxu0
    %v656 = vadd.f32 %v634, %v655
    %v657 = vpop.f32.mrf.mxu0
    %v658 = vadd.f32 %v634, %v657
    %659 = vdwg.mxu0
    %660 = vmatpush.bf16.msra.mxu0 %v530
    %661 = vmatpush.bf16.msra.mxu0 %v524
    %662 = vmatpush.bf16.msra.mxu0 %v518
    %663 = vmatpush.bf16.msra.mxu0 %v512
    %664 = vmatpush.bf16.msra.mxu0 %v506
    %665 = vmatpush.bf16.msra.mxu0 %v500
    %666 = vmatpush.bf16.msra.mxu0 %v494
    %667 = vmatpush.bf16.msra.mxu0 %v488
    %668 = vmatmul.bf16.gmra.mxu0 %v53
    %v669 = vpop.f32.mrf.mxu0
    %v670 = vadd.f32 %v656, %v669
    %v671 = vpop.f32.mrf.mxu0
    %v672 = vadd.f32 %v658, %v671
    %673 = vdwg.mxu0
    %674 = vmatpush.bf16.msra.mxu0 %v578
    %675 = vmatpush.bf16.msra.mxu0 %v572
    %676 = vmatpush.bf16.msra.mxu0 %v566
    %677 = vmatpush.bf16.msra.mxu0 %v560
    %678 = vmatpush.bf16.msra.mxu0 %v554
    %679 = vmatpush.bf16.msra.mxu0 %v548
    %680 = vmatpush.bf16.msra.mxu0 %v542
    %681 = vmatpush.bf16.msra.mxu0 %v536
    %682 = vmatmul.bf16.gmra.mxu0 %v54
    %v683 = vpop.f32.mrf.mxu0
    %v684 = vadd.f32 %v670, %v683
    %v685 = vpop.f32.mrf.mxu0
    %v686 = vadd.f32 %v672, %v685
    %687 = vdwg.mxu0
    %688 = vmatpush.bf16.msra.mxu0 %v626
    %689 = vmatpush.bf16.msra.mxu0 %v620
    %690 = vmatpush.bf16.msra.mxu0 %v614
    %691 = vmatpush.bf16.msra.mxu0 %v608
    %692 = vmatpush.bf16.msra.mxu0 %v602
    %693 = vmatpush.bf16.msra.mxu0 %v596
    %694 = vmatpush.bf16.msra.mxu0 %v590
    %695 = vmatpush.bf16.msra.mxu0 %v584
    %696 = vmatmul.bf16.gmra.mxu0 %v55
    %v697 = vpop.f32.mrf.mxu0
    %v698 = vadd.f32 %v684, %v697
    %v699 = vpop.f32.mrf.mxu0
    %v700 = vadd.f32 %v686, %v699
    %701 = vdwg.mxu0
    %702 = vmatpush.bf16.msra.mxu0 %v483
    %703 = vmatpush.bf16.msra.mxu0 %v477
    %704 = vmatpush.bf16.msra.mxu0 %v471
    %705 = vmatpush.bf16.msra.mxu0 %v465
    %706 = vmatpush.bf16.msra.mxu0 %v459
    %707 = vmatpush.bf16.msra.mxu0 %v453
    %708 = vmatpush.bf16.msra.mxu0 %v447
    %709 = vmatpush.bf16.msra.mxu0 %v441
    %710 = vmatmul.bf16.gmra.mxu0 %v52
    %v711 = vpop.f32.mrf.mxu0
    %v712 = vadd.f32 %v635, %v711
    %v713 = vpop.f32.mrf.mxu0
    %v714 = vadd.f32 %v635, %v713
    %715 = vdwg.mxu0
    %716 = vmatpush.bf16.msra.mxu0 %v531
    %717 = vmatpush.bf16.msra.mxu0 %v525
    %718 = vmatpush.bf16.msra.mxu0 %v519
    %719 = vmatpush.bf16.msra.mxu0 %v513
    %720 = vmatpush.bf16.msra.mxu0 %v507
    %721 = vmatpush.bf16.msra.mxu0 %v501
    %722 = vmatpush.bf16.msra.mxu0 %v495
    %723 = vmatpush.bf16.msra.mxu0 %v489
    %724 = vmatmul.bf16.gmra.mxu0 %v53
    %v725 = vpop.f32.mrf.mxu0
    %v726 = vadd.f32 %v712, %v725
    %v727 = vpop.f32.mrf.mxu0
    %v728 = vadd.f32 %v714, %v727
    %729 = vdwg.mxu0
    %730 = vmatpush.bf16.msra.mxu0 %v579
    %731 = vmatpush.bf16.msra.mxu0 %v573
    %732 = vmatpush.bf16.msra.mxu0 %v567
    %733 = vmatpush.bf16.msra.mxu0 %v561
    %734 = vmatpush.bf16.msra.mxu0 %v555
    %735 = vmatpush.bf16.msra.mxu0 %v549
    %736 = vmatpush.bf16.msra.mxu0 %v543
    %737 = vmatpush.bf16.msra.mxu0 %v537
    %738 = vmatmul.bf16.gmra.mxu0 %v54
    %v739 = vpop.f32.mrf.mxu0
    %v740 = vadd.f32 %v726, %v739
    %v741 = vpop.f32.mrf.mxu0
    %v742 = vadd.f32 %v728, %v741
    %743 = vdwg.mxu0
    %744 = vmatpush.bf16.msra.mxu0 %v627
    %745 = vmatpush.bf16.msra.mxu0 %v621
    %746 = vmatpush.bf16.msra.mxu0 %v615
    %747 = vmatpush.bf16.msra.mxu0 %v609
    %748 = vmatpush.bf16.msra.mxu0 %v603
    %749 = vmatpush.bf16.msra.mxu0 %v597
    %750 = vmatpush.bf16.msra.mxu0 %v591
    %751 = vmatpush.bf16.msra.mxu0 %v585
    %752 = vmatmul.bf16.gmra.mxu0 %v55
    %v753 = vpop.f32.mrf.mxu0
    %v754 = vadd.f32 %v740, %v753
    %v755 = vpop.f32.mrf.mxu0
    %v756 = vadd.f32 %v742, %v755
    %757 = vdwg.mxu0
    %758 = vmatpush.bf16.msra.mxu0 %v484
    %759 = vmatpush.bf16.msra.mxu0 %v478
    %760 = vmatpush.bf16.msra.mxu0 %v472
    %761 = vmatpush.bf16.msra.mxu0 %v466
    %762 = vmatpush.bf16.msra.mxu0 %v460
    %763 = vmatpush.bf16.msra.mxu0 %v454
    %764 = vmatpush.bf16.msra.mxu0 %v448
    %765 = vmatpush.bf16.msra.mxu0 %v442
    %766 = vmatmul.bf16.gmra.mxu0 %v52
    %v767 = vpop.f32.mrf.mxu0
    %v768 = vadd.f32 %v636, %v767
    %v769 = vpop.f32.mrf.mxu0
    %v770 = vadd.f32 %v636, %v769
    %771 = vdwg.mxu0
    %772 = vmatpush.bf16.msra.mxu0 %v532
    %773 = vmatpush.bf16.msra.mxu0 %v526
    %774 = vmatpush.bf16.msra.mxu0 %v520
    %775 = vmatpush.bf16.msra.mxu0 %v514
    %776 = vmatpush.bf16.msra.mxu0 %v508
    %777 = vmatpush.bf16.msra.mxu0 %v502
    %778 = vmatpush.bf16.msra.mxu0 %v496
    %779 = vmatpush.bf16.msra.mxu0 %v490
    %780 = vmatmul.bf16.gmra.mxu0 %v53
    %v781 = vpop.f32.mrf.mxu0
    %v782 = vadd.f32 %v768, %v781
    %v783 = vpop.f32.mrf.mxu0
    %v784 = vadd.f32 %v770, %v783
    %785 = vdwg.mxu0
    %786 = vmatpush.bf16.msra.mxu0 %v580
    %787 = vmatpush.bf16.msra.mxu0 %v574
    %788 = vmatpush.bf16.msra.mxu0 %v568
    %789 = vmatpush.bf16.msra.mxu0 %v562
    %790 = vmatpush.bf16.msra.mxu0 %v556
    %791 = vmatpush.bf16.msra.mxu0 %v550
    %792 = vmatpush.bf16.msra.mxu0 %v544
    %793 = vmatpush.bf16.msra.mxu0 %v538
    %794 = vmatmul.bf16.gmra.mxu0 %v54
    %v795 = vpop.f32.mrf.mxu0
    %v796 = vadd.f32 %v782, %v795
    %v797 = vpop.f32.mrf.mxu0
    %v798 = vadd.f32 %v784, %v797
    %799 = vdwg.mxu0
    %800 = vmatpush.bf16.msra.mxu0 %v628
    %801 = vmatpush.bf16.msra.mxu0 %v622
    %802 = vmatpush.bf16.msra.mxu0 %v616
    %803 = vmatpush.bf16.msra.mxu0 %v610
    %804 = vmatpush.bf16.msra.mxu0 %v604
    %805 = vmatpush.bf16.msra.mxu0 %v598
    %806 = vmatpush.bf16.msra.mxu0 %v592
    %807 = vmatpush.bf16.msra.mxu0 %v586
    %808 = vmatmul.bf16.gmra.mxu0 %v55
    %v809 = vpop.f32.mrf.mxu0
    %v810 = vadd.f32 %v796, %v809
    %v811 = vpop.f32.mrf.mxu0
    %v812 = vadd.f32 %v798, %v811
    %813 = vdwg.mxu0
    %814 = vmatpush.bf16.msra.mxu0 %v485
    %815 = vmatpush.bf16.msra.mxu0 %v479
    %816 = vmatpush.bf16.msra.mxu0 %v473
    %817 = vmatpush.bf16.msra.mxu0 %v467
    %818 = vmatpush.bf16.msra.mxu0 %v461
    %819 = vmatpush.bf16.msra.mxu0 %v455
    %820 = vmatpush.bf16.msra.mxu0 %v449
    %821 = vmatpush.bf16.msra.mxu0 %v443
    %822 = vmatmul.bf16.gmra.mxu0 %v52
    %v823 = vpop.f32.mrf.mxu0
    %v824 = vadd.f32 %v637, %v823
    %v825 = vpop.f32.mrf.mxu0
    %v826 = vadd.f32 %v637, %v825
    %827 = vdwg.mxu0
    %828 = vmatpush.bf16.msra.mxu0 %v533
    %829 = vmatpush.bf16.msra.mxu0 %v527
    %830 = vmatpush.bf16.msra.mxu0 %v521
    %831 = vmatpush.bf16.msra.mxu0 %v515
    %832 = vmatpush.bf16.msra.mxu0 %v509
    %833 = vmatpush.bf16.msra.mxu0 %v503
    %834 = vmatpush.bf16.msra.mxu0 %v497
    %835 = vmatpush.bf16.msra.mxu0 %v491
    %836 = vmatmul.bf16.gmra.mxu0 %v53
    %v837 = vpop.f32.mrf.mxu0
    %v838 = vadd.f32 %v824, %v837
    %v839 = vpop.f32.mrf.mxu0
    %v840 = vadd.f32 %v826, %v839
    %841 = vdwg.mxu0
    %842 = vmatpush.bf16.msra.mxu0 %v581
    %843 = vmatpush.bf16.msra.mxu0 %v575
    %844 = vmatpush.bf16.msra.mxu0 %v569
    %845 = vmatpush.bf16.msra.mxu0 %v563
    %846 = vmatpush.bf16.msra.mxu0 %v557
    %847 = vmatpush.bf16.msra.mxu0 %v551
    %848 = vmatpush.bf16.msra.mxu0 %v545
    %849 = vmatpush.bf16.msra.mxu0 %v539
    %850 = vmatmul.bf16.gmra.mxu0 %v54
    %v851 = vpop.f32.mrf.mxu0
    %v852 = vadd.f32 %v838, %v851
    %v853 = vpop.f32.mrf.mxu0
    %v854 = vadd.f32 %v840, %v853
    %855 = vdwg.mxu0
    %856 = vmatpush.bf16.msra.mxu0 %v629
    %857 = vmatpush.bf16.msra.mxu0 %v623
    %858 = vmatpush.bf16.msra.mxu0 %v617
    %859 = vmatpush.bf16.msra.mxu0 %v611
    %860 = vmatpush.bf16.msra.mxu0 %v605
    %861 = vmatpush.bf16.msra.mxu0 %v599
    %862 = vmatpush.bf16.msra.mxu0 %v593
    %863 = vmatpush.bf16.msra.mxu0 %v587
    %864 = vmatmul.bf16.gmra.mxu0 %v55
    %v865 = vpop.f32.mrf.mxu0
    %v866 = vadd.f32 %v852, %v865
    %v867 = vpop.f32.mrf.mxu0
    %v868 = vadd.f32 %v854, %v867
    %869 = vdwg.mxu0
    %870 = vmatpush.bf16.msra.mxu0 %v486
    %871 = vmatpush.bf16.msra.mxu0 %v480
    %872 = vmatpush.bf16.msra.mxu0 %v474
    %873 = vmatpush.bf16.msra.mxu0 %v468
    %874 = vmatpush.bf16.msra.mxu0 %v462
    %875 = vmatpush.bf16.msra.mxu0 %v456
    %876 = vmatpush.bf16.msra.mxu0 %v450
    %877 = vmatpush.bf16.msra.mxu0 %v444
    %878 = vmatmul.bf16.gmra.mxu0 %v52
    %v879 = vpop.f32.mrf.mxu0
    %v880 = vadd.f32 %v638, %v879
    %v881 = vpop.f32.mrf.mxu0
    %v882 = vadd.f32 %v638, %v881
    %883 = vdwg.mxu0
    %884 = vmatpush.bf16.msra.mxu0 %v534
    %885 = vmatpush.bf16.msra.mxu0 %v528
    %886 = vmatpush.bf16.msra.mxu0 %v522
    %887 = vmatpush.bf16.msra.mxu0 %v516
    %888 = vmatpush.bf16.msra.mxu0 %v510
    %889 = vmatpush.bf16.msra.mxu0 %v504
    %890 = vmatpush.bf16.msra.mxu0 %v498
    %891 = vmatpush.bf16.msra.mxu0 %v492
    %892 = vmatmul.bf16.gmra.mxu0 %v53
    %v893 = vpop.f32.mrf.mxu0
    %v894 = vadd.f32 %v880, %v893
    %v895 = vpop.f32.mrf.mxu0
    %v896 = vadd.f32 %v882, %v895
    %897 = vdwg.mxu0
    %898 = vmatpush.bf16.msra.mxu0 %v582
    %899 = vmatpush.bf16.msra.mxu0 %v576
    %900 = vmatpush.bf16.msra.mxu0 %v570
    %901 = vmatpush.bf16.msra.mxu0 %v564
    %902 = vmatpush.bf16.msra.mxu0 %v558
    %903 = vmatpush.bf16.msra.mxu0 %v552
    %904 = vmatpush.bf16.msra.mxu0 %v546
    %905 = vmatpush.bf16.msra.mxu0 %v540
    %906 = vmatmul.bf16.gmra.mxu0 %v54
    %v907 = vpop.f32.mrf.mxu0
    %v908 = vadd.f32 %v894, %v907
    %v909 = vpop.f32.mrf.mxu0
    %v910 = vadd.f32 %v896, %v909
    %911 = vdwg.mxu0
    %912 = vmatpush.bf16.msra.mxu0 %v630
    %913 = vmatpush.bf16.msra.mxu0 %v624
    %914 = vmatpush.bf16.msra.mxu0 %v618
    %915 = vmatpush.bf16.msra.mxu0 %v612
    %916 = vmatpush.bf16.msra.mxu0 %v606
    %917 = vmatpush.bf16.msra.mxu0 %v600
    %918 = vmatpush.bf16.msra.mxu0 %v594
    %919 = vmatpush.bf16.msra.mxu0 %v588
    %920 = vmatmul.bf16.gmra.mxu0 %v55
    %v921 = vpop.f32.mrf.mxu0
    %v922 = vadd.f32 %v908, %v921
    %v923 = vpop.f32.mrf.mxu0
    %v924 = vadd.f32 %v910, %v923
    %925 = vdwg.mxu0
    %926 = vmatpush.bf16.msra.mxu0 %v487
    %927 = vmatpush.bf16.msra.mxu0 %v481
    %928 = vmatpush.bf16.msra.mxu0 %v475
    %929 = vmatpush.bf16.msra.mxu0 %v469
    %930 = vmatpush.bf16.msra.mxu0 %v463
    %931 = vmatpush.bf16.msra.mxu0 %v457
    %932 = vmatpush.bf16.msra.mxu0 %v451
    %933 = vmatpush.bf16.msra.mxu0 %v445
    %934 = vmatmul.bf16.gmra.mxu0 %v52
    %v935 = vpop.f32.mrf.mxu0
    %v936 = vadd.f32 %v639, %v935
    %v937 = vpop.f32.mrf.mxu0
    %v938 = vadd.f32 %v639, %v937
    %939 = vdwg.mxu0
    %940 = vmatpush.bf16.msra.mxu0 %v535
    %941 = vmatpush.bf16.msra.mxu0 %v529
    %942 = vmatpush.bf16.msra.mxu0 %v523
    %943 = vmatpush.bf16.msra.mxu0 %v517
    %944 = vmatpush.bf16.msra.mxu0 %v511
    %945 = vmatpush.bf16.msra.mxu0 %v505
    %946 = vmatpush.bf16.msra.mxu0 %v499
    %947 = vmatpush.bf16.msra.mxu0 %v493
    %948 = vmatmul.bf16.gmra.mxu0 %v53
    %v949 = vpop.f32.mrf.mxu0
    %v950 = vadd.f32 %v936, %v949
    %v951 = vpop.f32.mrf.mxu0
    %v952 = vadd.f32 %v938, %v951
    %953 = vdwg.mxu0
    %954 = vmatpush.bf16.msra.mxu0 %v583
    %955 = vmatpush.bf16.msra.mxu0 %v577
    %956 = vmatpush.bf16.msra.mxu0 %v571
    %957 = vmatpush.bf16.msra.mxu0 %v565
    %958 = vmatpush.bf16.msra.mxu0 %v559
    %959 = vmatpush.bf16.msra.mxu0 %v553
    %960 = vmatpush.bf16.msra.mxu0 %v547
    %961 = vmatpush.bf16.msra.mxu0 %v541
    %962 = vmatmul.bf16.gmra.mxu0 %v54
    %v963 = vpop.f32.mrf.mxu0
    %v964 = vadd.f32 %v950, %v963
    %v965 = vpop.f32.mrf.mxu0
    %v966 = vadd.f32 %v952, %v965
    %967 = vdwg.mxu0
    %968 = vmatpush.bf16.msra.mxu0 %v631
    %969 = vmatpush.bf16.msra.mxu0 %v625
    %970 = vmatpush.bf16.msra.mxu0 %v619
    %971 = vmatpush.bf16.msra.mxu0 %v613
    %972 = vmatpush.bf16.msra.mxu0 %v607
    %973 = vmatpush.bf16.msra.mxu0 %v601
    %974 = vmatpush.bf16.msra.mxu0 %v595
    %975 = vmatpush.bf16.msra.mxu0 %v589
    %976 = vmatmul.bf16.gmra.mxu0 %v55
    %v977 = vpop.f32.mrf.mxu0
    %v978 = vadd.f32 %v964, %v977
    %v979 = vpop.f32.mrf.mxu0
    %v980 = vadd.f32 %v966, %v979
    %981 = vdwg.mxu0
    %982 = vst [vmem:[%s3] sm:$0xff] %v698
    %983 = vst [vmem:[%s3 + $0x8] sm:$0xff] %v754
    %984 = vst [vmem:[%s3 + $0x10] sm:$0xff] %v810
    %985 = vst [vmem:[%s3 + $0x18] sm:$0xff] %v866
    %986 = vst [vmem:[%s3 + $0x20] sm:$0xff] %v922
    %987 = vst [vmem:[%s3 + $0x28] sm:$0xff] %v978
    %988 = vst [vmem:[%s3 + $0x30] sm:$0xff] %v700
    %989 = vst [vmem:[%s3 + $0x38] sm:$0xff] %v756
    %990 = vst [vmem:[%s3 + $0x40] sm:$0xff] %v812
    %991 = vst [vmem:[%s3 + $0x48] sm:$0xff] %v868
    %992 = vst [vmem:[%s3 + $0x50] sm:$0xff] %v924
    %993 = vst [vmem:[%s3 + $0x58] sm:$0xff] %v980
    // Predicated region
    $region22: #{hear_detector_forward.5} parent=1 // pred_check
      _
    $region23: #{hear_detector_forward.5} parent=1 // pred_check_branch
      %995 = sbr.rel (0) target = $region25
    $region24: #{hear_detector_forward.5} parent=1 // pred_region
      _
    $region25: #{hear_detector_forward.5} parent=1 // pred_fallthru
      _
    // Predicated region
    $region26: #{hear_detector_forward.5} parent=1 // pred_check
      _
    $region27: #{hear_detector_forward.5} parent=1 // pred_check_branch
      %997 = sbr.rel (0) target = $region29
    $region28: #{hear_detector_forward.5} parent=1 // pred_region
      _
    $region29: #{hear_detector_forward.5} parent=1 // pred_fallthru
      _
    %998 = vsyncpa [#allocation3], 1
    %999 = vsyncpa [#allocation5], 1

</llo_original>
